<compile_context>
chip_gen: v7x
topology: tpu7x:2x2x1
jax: 0.10.0
libtpu: 0.0.40
codegen_flags: <defaults>
</compile_context>

<pallas_src>
import jax
import jax.numpy as jnp
from jax.experimental import pallas as pl
from jax.experimental.pallas import tpu as pltpu

LANES = 128


def attention_gate_kernel(wg_ref, wx_ref, bgx_ref, wpsi_ref, bpsi_ref,
                          g_ref, x_ref, o_ref):
    """One (batch, spatial-tile) grid step.

    g_ref: (Cg, tR, 128) VMEM     x_ref, o_ref: (Cl, tR, 128) VMEM
    wg_ref: (Cint, Cg) SMEM       wx_ref: (Cint, Cl) SMEM
    bgx_ref: (Cint,) SMEM (bg+bx) wpsi_ref: (Cint,) SMEM   bpsi_ref: (1,) SMEM
    """
    cint, cg = wg_ref.shape
    cl = x_ref.shape[0]
    tile = x_ref.shape[1:]                     # (tR, 128) -> full-vreg math

    g = g_ref[...].astype(jnp.float32)         # (Cg, tR, 128)
    x = x_ref[...].astype(jnp.float32)         # (Cl, tR, 128)

    # psi pre-activation accumulator, seeded with the (folded) psi bias.
    psi = jnp.full(tile, bpsi_ref[0], dtype=jnp.float32)

    # Unrolled channel loops: VPU broadcast-multiply-adds on full (tR,128)
    # tiles; both input convs fused into one accumulator per output channel.
    for o in range(cint):
        acc = jnp.full(tile, bgx_ref[o], dtype=jnp.float32)
        for c in range(cg):
            acc = acc + wg_ref[o, c] * g[c]
        for c in range(cl):
            acc = acc + wx_ref[o, c] * x[c]
        psi = psi + wpsi_ref[o] * jnp.maximum(acc, 0.0)   # relu + psi conv

    psi = jax.nn.sigmoid(psi)                  # exp -> EUP slot

    # Gate the skip connection; stores are lane-dense (last dim = 128).
    o_ref[...] = (psi[None, :, :] * x).astype(o_ref.dtype)


def fold_bn(w, b, gamma, beta, mean, var, eps=1e-5):
    """Fold BatchNorm (eval mode) into a preceding 1x1 conv.

    w: (Cout, Cin), b: (Cout,).  Returns folded (w, b).
    """
    scale = gamma / jnp.sqrt(var + eps)
    w_f = w * scale[:, None]
    b_f = (b - mean) * scale + beta
    return w_f, b_f


def _pick_tile_rows(rows, cap_rows):
    """Largest spatial-row tile dividing `rows`, (8,128)-friendly, <= cap."""
    if rows <= cap_rows:
        return rows
    t = (min(rows, cap_rows) // 8) * 8
    while t >= 8:
        if rows % t == 0:
            return t
        t -= 8
    return rows  # no 8-multiple divisor fits the cap; use the full extent


def attention_gate(g, x, params):
    """g: (N, feat_g, H, W), x: (N, feat_l, H, W)  (NCHW like PyTorch)."""
    N, Cg, H, W = g.shape
    Nx, Cl, Hx, Wx = x.shape
    assert (N, H, W) == (Nx, Hx, Wx)

    # Fold BN into the 1x1 convs (conv weight (Cout, Cin, 1, 1) -> (Cout, Cin)).
    wg, bg = fold_bn(params["wg"][:, :, 0, 0], params["bg"],
                     params["bn_g_gamma"], params["bn_g_beta"],
                     params["bn_g_mean"], params["bn_g_var"])
    wx, bx = fold_bn(params["wx"][:, :, 0, 0], params["bx"],
                     params["bn_x_gamma"], params["bn_x_beta"],
                     params["bn_x_mean"], params["bn_x_var"])
    wpsi, bpsi = fold_bn(params["wpsi"][:, :, 0, 0], params["bpsi"],
                         params["bn_p_gamma"], params["bn_p_beta"],
                         params["bn_p_mean"], params["bn_p_var"])
    Cint = wg.shape[0]

    wg_s = wg.astype(jnp.float32)              # (Cint, Cg)
    wx_s = wx.astype(jnp.float32)              # (Cint, Cl)
    bgx_s = (bg + bx).astype(jnp.float32)      # (Cint,)  fused biases
    wpsi_s = wpsi[0].astype(jnp.float32)       # (Cint,)
    bpsi_s = bpsi.astype(jnp.float32)          # (1,)

    # NCHW -> (N, C, rows, 128): pure reshapes (+ optional zero pad), no transpose.
    S = H * W
    S_pad = ((S + LANES - 1) // LANES) * LANES
    rows = S_pad // LANES
    g_r = g.reshape(N, Cg, S)
    x_r = x.reshape(N, Cl, S)
    if S_pad != S:
        pad = ((0, 0), (0, 0), (0, S_pad - S))
        g_r = jnp.pad(g_r, pad)
        x_r = jnp.pad(x_r, pad)
    g_r = g_r.reshape(N, Cg, rows, LANES)
    x_r = x_r.reshape(N, Cl, rows, LANES)

    # Spatial tile sized against an explicit VMEM budget (~8 MiB per step,
    # double-buffered -> comfortably inside v7x's 64 MiB physical VMEM).
    itemsize = jnp.dtype(x.dtype).itemsize
    target_step_bytes = 8 * 2**20
    cap_rows = max(8, target_step_bytes // max(1, (Cg + 2 * Cl) * LANES * itemsize))
    tR = _pick_tile_rows(rows, cap_rows)
    step_bytes = (Cg + 2 * Cl) * tR * LANES * itemsize
    vmem_limit = int(min(40 * 2**20, max(16 * 2**20, 3 * step_bytes)))

    grid = (N, rows // tR)

    flops = N * S * (2 * Cint * (Cg + Cl) + 3 * Cint + 2 * Cl)
    cost = pl.CostEstimate(
        flops=int(flops),
        transcendentals=int(N * S),
        bytes_accessed=int((Cg + 2 * Cl) * N * S_pad * itemsize),
    )

    smem_spec = pl.BlockSpec(memory_space=pltpu.MemorySpace.SMEM)
    blk = lambda C: pl.BlockSpec((pl.Squeezed(), C, tR, LANES),
                                 lambda n, r: (n, 0, r, 0))

    out_r = pl.pallas_call(
        attention_gate_kernel,
        out_shape=jax.ShapeDtypeStruct((N, Cl, rows, LANES), x.dtype),
        grid=grid,
        in_specs=[
            smem_spec,      # wg
            smem_spec,      # wx
            smem_spec,      # bg + bx
            smem_spec,      # wpsi
            smem_spec,      # bpsi
            blk(Cg),        # g rows
            blk(Cl),        # x rows
        ],
        out_specs=blk(Cl),
        compiler_params=pltpu.CompilerParams(
            dimension_semantics=("parallel", "parallel"),
            vmem_limit_bytes=vmem_limit,
        ),
        cost_estimate=cost,
    )(wg_s, wx_s, bgx_s, wpsi_s, bpsi_s, g_r, x_r)

    out = out_r.reshape(N, Cl, S_pad)
    if S_pad != S:
        out = out[:, :, :S]
    return out.reshape(N, Cl, H, W)


def attention_gate_ref(g, x, params, eps=1e-5):
    """Pure-JAX reference matching the PyTorch forward (BN in eval mode)."""
    def conv1x1(inp, w, b):  # inp NCHW, w (Cout, Cin, 1, 1)
        return jnp.einsum("nchw,oc->nohw", inp, w[:, :, 0, 0]) + b[None, :, None, None]

    def bn(inp, gamma, beta, mean, var):
        s = gamma / jnp.sqrt(var + eps)
        return inp * s[None, :, None, None] + (beta - mean * s)[None, :, None, None]

    g_out = bn(conv1x1(g, params["wg"], params["bg"]),
               params["bn_g_gamma"], params["bn_g_beta"],
               params["bn_g_mean"], params["bn_g_var"])
    x_out = bn(conv1x1(x, params["wx"], params["bx"]),
               params["bn_x_gamma"], params["bn_x_beta"],
               params["bn_x_mean"], params["bn_x_var"])
    y = jnp.maximum(g_out + x_out, 0.0)
    psi = bn(conv1x1(y, params["wpsi"], params["bpsi"]),
             params["bn_p_gamma"], params["bn_p_beta"],
             params["bn_p_mean"], params["bn_p_var"])
    psi = jax.nn.sigmoid(psi)
    return psi * x


def make_params(key, feat_g, feat_l, feat_int):
    ks = jax.random.split(key, 12)
    p = {
        # conv weights (Cout, Cin, 1, 1) + biases
        "wg": 0.1 * jax.random.normal(ks[0], (feat_int, feat_g, 1, 1), jnp.float32),
        "bg": 0.1 * jax.random.normal(ks[1], (feat_int,), jnp.float32),
        "wx": 0.1 * jax.random.normal(ks[2], (feat_int, feat_l, 1, 1), jnp.float32),
        "bx": 0.1 * jax.random.normal(ks[3], (feat_int,), jnp.float32),
        "wpsi": 0.1 * jax.random.normal(ks[4], (1, feat_int, 1, 1), jnp.float32),
        "bpsi": 0.1 * jax.random.normal(ks[5], (1,), jnp.float32),
        # BatchNorm affine + running stats (eval-mode semantics)
        "bn_g_gamma": 1.0 + 0.05 * jax.random.normal(ks[6], (feat_int,), jnp.float32),
        "bn_g_beta": 0.05 * jax.random.normal(ks[7], (feat_int,), jnp.float32),
        "bn_g_mean": jnp.zeros((feat_int,), jnp.float32),
        "bn_g_var": jnp.ones((feat_int,), jnp.float32),
        "bn_x_gamma": 1.0 + 0.05 * jax.random.normal(ks[8], (feat_int,), jnp.float32),
        "bn_x_beta": 0.05 * jax.random.normal(ks[9], (feat_int,), jnp.float32),
        "bn_x_mean": jnp.zeros((feat_int,), jnp.float32),
        "bn_x_var": jnp.ones((feat_int,), jnp.float32),
        "bn_p_gamma": 1.0 + 0.05 * jax.random.normal(ks[10], (1,), jnp.float32),
        "bn_p_beta": 0.05 * jax.random.normal(ks[11], (1,), jnp.float32),
        "bn_p_mean": jnp.zeros((1,), jnp.float32),
        "bn_p_var": jnp.ones((1,), jnp.float32),
    }
    return p


if __name__ == "__main__":
    key = jax.random.PRNGKey(0)
    kg, kx, kp = jax.random.split(key, 3)

    N, feat_g, feat_l, feat_int, H, W = 2, 4, 4, 8, 16, 16
    g = jax.random.normal(kg, (N, feat_g, H, W), jnp.float32)
    x = jax.random.normal(kx, (N, feat_l, H, W), jnp.float32)
    params = make_params(kp, feat_g, feat_l, feat_int)

    agate = jax.jit(attention_gate)
    out = jax.block_until_ready(agate(g, x, params))

    ref = jax.block_until_ready(attention_gate_ref(g, x, params))
    assert out.shape == x.shape
    assert jnp.allclose(out, ref, atol=1e-5, rtol=1e-5), "mismatch vs reference"

    print("KERNEL_OK")
</pallas_src>

<mosaic_0001>
module attributes {stable_mosaic.version = 11 : i64} {
  func.func @attention_gate_kernel(%arg0: i32, %arg1: i32, %arg2: memref<8x4xf32, #tpu.memory_space<smem>>, %arg3: memref<8x4xf32, #tpu.memory_space<smem>>, %arg4: memref<8xf32, #tpu.memory_space<smem>>, %arg5: memref<8xf32, #tpu.memory_space<smem>>, %arg6: memref<1xf32, #tpu.memory_space<smem>>, %arg7: memref<1x4x2x128xf32, #tpu.memory_space<vmem>>, %arg8: memref<1x4x2x128xf32, #tpu.memory_space<vmem>>, %arg9: memref<1x4x2x128xf32, #tpu.memory_space<vmem>>) attributes {dimension_semantics = [#tpu.dimension_semantics<parallel>, #tpu.dimension_semantics<parallel>], iteration_bounds = array<i64: 2, 1>, scalar_prefetch = 0 : i64, scratch_operands = 0 : i64, tpu.core_type = #tpu.core_type<tc>, window_params = [{transform_indices = @transform_0, window_bounds = array<i64: 8, 4>}, {transform_indices = @transform_1, window_bounds = array<i64: 8, 4>}, {transform_indices = @transform_2, window_bounds = array<i64: 8>}, {transform_indices = @transform_3, window_bounds = array<i64: 8>}, {transform_indices = @transform_4, window_bounds = array<i64: 1>}, {transform_indices = @transform_5, window_bounds = array<i64: 1, 4, 2, 128>}, {transform_indices = @transform_6, window_bounds = array<i64: 1, 4, 2, 128>}, {transform_indices = @transform_7, window_bounds = array<i64: 1, 4, 2, 128>}]} {
    %c0 = arith.constant 0 : index
    %c0_0 = arith.constant 0 : index
    %c0_1 = arith.constant 0 : index
    %c0_2 = arith.constant 0 : index
    %0 = vector.load %arg7[%c0, %c0_0, %c0_1, %c0_2] : memref<1x4x2x128xf32, #tpu.memory_space<vmem>>, vector<1x4x2x128xf32>
    %1 = vector.shape_cast %0 : vector<1x4x2x128xf32> to vector<4x2x128xf32>
    %c0_3 = arith.constant 0 : index
    %c0_4 = arith.constant 0 : index
    %c0_5 = arith.constant 0 : index
    %c0_6 = arith.constant 0 : index
    %2 = vector.load %arg8[%c0_3, %c0_4, %c0_5, %c0_6] : memref<1x4x2x128xf32, #tpu.memory_space<vmem>>, vector<1x4x2x128xf32>
    %3 = vector.shape_cast %2 : vector<1x4x2x128xf32> to vector<4x2x128xf32>
    %c0_7 = arith.constant 0 : index
    %4 = memref.load %arg6[%c0_7] : memref<1xf32, #tpu.memory_space<smem>>
    %5 = vector.broadcast %4 : f32 to vector<2x128xf32>
    %c0_8 = arith.constant 0 : index
    %6 = memref.load %arg4[%c0_8] : memref<8xf32, #tpu.memory_space<smem>>
    %7 = vector.broadcast %6 : f32 to vector<2x128xf32>
    %c0_9 = arith.constant 0 : index
    %c0_10 = arith.constant 0 : index
    %8 = memref.load %arg2[%c0_9, %c0_10] : memref<8x4xf32, #tpu.memory_space<smem>>
    %9 = vector.extract_strided_slice %1 {offsets = [0, 0, 0], sizes = [1, 2, 128], strides = [1, 1, 1]} : vector<4x2x128xf32> to vector<1x2x128xf32>
    %10 = vector.shape_cast %9 : vector<1x2x128xf32> to vector<2x128xf32>
    %11 = vector.broadcast %8 : f32 to vector<2x128xf32>
    %12 = arith.mulf %11, %10 : vector<2x128xf32>
    %13 = arith.addf %7, %12 : vector<2x128xf32>
    %c0_11 = arith.constant 0 : index
    %c1 = arith.constant 1 : index
    %14 = memref.load %arg2[%c0_11, %c1] : memref<8x4xf32, #tpu.memory_space<smem>>
    %15 = vector.extract_strided_slice %1 {offsets = [1, 0, 0], sizes = [1, 2, 128], strides = [1, 1, 1]} : vector<4x2x128xf32> to vector<1x2x128xf32>
    %16 = vector.shape_cast %15 : vector<1x2x128xf32> to vector<2x128xf32>
    %17 = vector.broadcast %14 : f32 to vector<2x128xf32>
    %18 = arith.mulf %17, %16 : vector<2x128xf32>
    %19 = arith.addf %13, %18 : vector<2x128xf32>
    %c0_12 = arith.constant 0 : index
    %c2 = arith.constant 2 : index
    %20 = memref.load %arg2[%c0_12, %c2] : memref<8x4xf32, #tpu.memory_space<smem>>
    %21 = vector.extract_strided_slice %1 {offsets = [2, 0, 0], sizes = [1, 2, 128], strides = [1, 1, 1]} : vector<4x2x128xf32> to vector<1x2x128xf32>
    %22 = vector.shape_cast %21 : vector<1x2x128xf32> to vector<2x128xf32>
    %23 = vector.broadcast %20 : f32 to vector<2x128xf32>
    %24 = arith.mulf %23, %22 : vector<2x128xf32>
    %25 = arith.addf %19, %24 : vector<2x128xf32>
    %c0_13 = arith.constant 0 : index
    %c3 = arith.constant 3 : index
    %26 = memref.load %arg2[%c0_13, %c3] : memref<8x4xf32, #tpu.memory_space<smem>>
    %27 = vector.extract_strided_slice %1 {offsets = [3, 0, 0], sizes = [1, 2, 128], strides = [1, 1, 1]} : vector<4x2x128xf32> to vector<1x2x128xf32>
    %28 = vector.shape_cast %27 : vector<1x2x128xf32> to vector<2x128xf32>
    %29 = vector.broadcast %26 : f32 to vector<2x128xf32>
    %30 = arith.mulf %29, %28 : vector<2x128xf32>
    %31 = arith.addf %25, %30 : vector<2x128xf32>
    %c0_14 = arith.constant 0 : index
    %c0_15 = arith.constant 0 : index
    %32 = memref.load %arg3[%c0_14, %c0_15] : memref<8x4xf32, #tpu.memory_space<smem>>
    %33 = vector.extract_strided_slice %3 {offsets = [0, 0, 0], sizes = [1, 2, 128], strides = [1, 1, 1]} : vector<4x2x128xf32> to vector<1x2x128xf32>
    %34 = vector.shape_cast %33 : vector<1x2x128xf32> to vector<2x128xf32>
    %35 = vector.broadcast %32 : f32 to vector<2x128xf32>
    %36 = arith.mulf %35, %34 : vector<2x128xf32>
    %37 = arith.addf %31, %36 : vector<2x128xf32>
    %c0_16 = arith.constant 0 : index
    %c1_17 = arith.constant 1 : index
    %38 = memref.load %arg3[%c0_16, %c1_17] : memref<8x4xf32, #tpu.memory_space<smem>>
    %39 = vector.extract_strided_slice %3 {offsets = [1, 0, 0], sizes = [1, 2, 128], strides = [1, 1, 1]} : vector<4x2x128xf32> to vector<1x2x128xf32>
    %40 = vector.shape_cast %39 : vector<1x2x128xf32> to vector<2x128xf32>
    %41 = vector.broadcast %38 : f32 to vector<2x128xf32>
    %42 = arith.mulf %41, %40 : vector<2x128xf32>
    %43 = arith.addf %37, %42 : vector<2x128xf32>
    %c0_18 = arith.constant 0 : index
    %c2_19 = arith.constant 2 : index
    %44 = memref.load %arg3[%c0_18, %c2_19] : memref<8x4xf32, #tpu.memory_space<smem>>
    %45 = vector.extract_strided_slice %3 {offsets = [2, 0, 0], sizes = [1, 2, 128], strides = [1, 1, 1]} : vector<4x2x128xf32> to vector<1x2x128xf32>
    %46 = vector.shape_cast %45 : vector<1x2x128xf32> to vector<2x128xf32>
    %47 = vector.broadcast %44 : f32 to vector<2x128xf32>
    %48 = arith.mulf %47, %46 : vector<2x128xf32>
    %49 = arith.addf %43, %48 : vector<2x128xf32>
    %c0_20 = arith.constant 0 : index
    %c3_21 = arith.constant 3 : index
    %50 = memref.load %arg3[%c0_20, %c3_21] : memref<8x4xf32, #tpu.memory_space<smem>>
    %51 = vector.extract_strided_slice %3 {offsets = [3, 0, 0], sizes = [1, 2, 128], strides = [1, 1, 1]} : vector<4x2x128xf32> to vector<1x2x128xf32>
    %52 = vector.shape_cast %51 : vector<1x2x128xf32> to vector<2x128xf32>
    %53 = vector.broadcast %50 : f32 to vector<2x128xf32>
    %54 = arith.mulf %53, %52 : vector<2x128xf32>
    %55 = arith.addf %49, %54 : vector<2x128xf32>
    %c0_22 = arith.constant 0 : index
    %56 = memref.load %arg5[%c0_22] : memref<8xf32, #tpu.memory_space<smem>>
    %cst = arith.constant 0.000000e+00 : f32
    %57 = vector.broadcast %cst : f32 to vector<2x128xf32>
    %58 = arith.maximumf %55, %57 : vector<2x128xf32>
    %59 = vector.broadcast %56 : f32 to vector<2x128xf32>
    %60 = arith.mulf %59, %58 : vector<2x128xf32>
    %61 = arith.addf %5, %60 : vector<2x128xf32>
    %c1_23 = arith.constant 1 : index
    %62 = memref.load %arg4[%c1_23] : memref<8xf32, #tpu.memory_space<smem>>
    %63 = vector.broadcast %62 : f32 to vector<2x128xf32>
    %c1_24 = arith.constant 1 : index
    %c0_25 = arith.constant 0 : index
    %64 = memref.load %arg2[%c1_24, %c0_25] : memref<8x4xf32, #tpu.memory_space<smem>>
    %65 = vector.extract_strided_slice %1 {offsets = [0, 0, 0], sizes = [1, 2, 128], strides = [1, 1, 1]} : vector<4x2x128xf32> to vector<1x2x128xf32>
    %66 = vector.shape_cast %65 : vector<1x2x128xf32> to vector<2x128xf32>
    %67 = vector.broadcast %64 : f32 to vector<2x128xf32>
    %68 = arith.mulf %67, %66 : vector<2x128xf32>
    %69 = arith.addf %63, %68 : vector<2x128xf32>
    %c1_26 = arith.constant 1 : index
    %c1_27 = arith.constant 1 : index
    %70 = memref.load %arg2[%c1_26, %c1_27] : memref<8x4xf32, #tpu.memory_space<smem>>
    %71 = vector.extract_strided_slice %1 {offsets = [1, 0, 0], sizes = [1, 2, 128], strides = [1, 1, 1]} : vector<4x2x128xf32> to vector<1x2x128xf32>
    %72 = vector.shape_cast %71 : vector<1x2x128xf32> to vector<2x128xf32>
    %73 = vector.broadcast %70 : f32 to vector<2x128xf32>
    %74 = arith.mulf %73, %72 : vector<2x128xf32>
    %75 = arith.addf %69, %74 : vector<2x128xf32>
    %c1_28 = arith.constant 1 : index
    %c2_29 = arith.constant 2 : index
    %76 = memref.load %arg2[%c1_28, %c2_29] : memref<8x4xf32, #tpu.memory_space<smem>>
    %77 = vector.extract_strided_slice %1 {offsets = [2, 0, 0], sizes = [1, 2, 128], strides = [1, 1, 1]} : vector<4x2x128xf32> to vector<1x2x128xf32>
    %78 = vector.shape_cast %77 : vector<1x2x128xf32> to vector<2x128xf32>
    %79 = vector.broadcast %76 : f32 to vector<2x128xf32>
    %80 = arith.mulf %79, %78 : vector<2x128xf32>
    %81 = arith.addf %75, %80 : vector<2x128xf32>
    %c1_30 = arith.constant 1 : index
    %c3_31 = arith.constant 3 : index
    %82 = memref.load %arg2[%c1_30, %c3_31] : memref<8x4xf32, #tpu.memory_space<smem>>
    %83 = vector.extract_strided_slice %1 {offsets = [3, 0, 0], sizes = [1, 2, 128], strides = [1, 1, 1]} : vector<4x2x128xf32> to vector<1x2x128xf32>
    %84 = vector.shape_cast %83 : vector<1x2x128xf32> to vector<2x128xf32>
    %85 = vector.broadcast %82 : f32 to vector<2x128xf32>
    %86 = arith.mulf %85, %84 : vector<2x128xf32>
    %87 = arith.addf %81, %86 : vector<2x128xf32>
    %c1_32 = arith.constant 1 : index
    %c0_33 = arith.constant 0 : index
    %88 = memref.load %arg3[%c1_32, %c0_33] : memref<8x4xf32, #tpu.memory_space<smem>>
    %89 = vector.extract_strided_slice %3 {offsets = [0, 0, 0], sizes = [1, 2, 128], strides = [1, 1, 1]} : vector<4x2x128xf32> to vector<1x2x128xf32>
    %90 = vector.shape_cast %89 : vector<1x2x128xf32> to vector<2x128xf32>
    %91 = vector.broadcast %88 : f32 to vector<2x128xf32>
    %92 = arith.mulf %91, %90 : vector<2x128xf32>
    %93 = arith.addf %87, %92 : vector<2x128xf32>
    %c1_34 = arith.constant 1 : index
    %c1_35 = arith.constant 1 : index
    %94 = memref.load %arg3[%c1_34, %c1_35] : memref<8x4xf32, #tpu.memory_space<smem>>
    %95 = vector.extract_strided_slice %3 {offsets = [1, 0, 0], sizes = [1, 2, 128], strides = [1, 1, 1]} : vector<4x2x128xf32> to vector<1x2x128xf32>
    %96 = vector.shape_cast %95 : vector<1x2x128xf32> to vector<2x128xf32>
    %97 = vector.broadcast %94 : f32 to vector<2x128xf32>
    %98 = arith.mulf %97, %96 : vector<2x128xf32>
    %99 = arith.addf %93, %98 : vector<2x128xf32>
    %c1_36 = arith.constant 1 : index
    %c2_37 = arith.constant 2 : index
    %100 = memref.load %arg3[%c1_36, %c2_37] : memref<8x4xf32, #tpu.memory_space<smem>>
    %101 = vector.extract_strided_slice %3 {offsets = [2, 0, 0], sizes = [1, 2, 128], strides = [1, 1, 1]} : vector<4x2x128xf32> to vector<1x2x128xf32>
    %102 = vector.shape_cast %101 : vector<1x2x128xf32> to vector<2x128xf32>
    %103 = vector.broadcast %100 : f32 to vector<2x128xf32>
    %104 = arith.mulf %103, %102 : vector<2x128xf32>
    %105 = arith.addf %99, %104 : vector<2x128xf32>
    %c1_38 = arith.constant 1 : index
    %c3_39 = arith.constant 3 : index
    %106 = memref.load %arg3[%c1_38, %c3_39] : memref<8x4xf32, #tpu.memory_space<smem>>
    %107 = vector.extract_strided_slice %3 {offsets = [3, 0, 0], sizes = [1, 2, 128], strides = [1, 1, 1]} : vector<4x2x128xf32> to vector<1x2x128xf32>
    %108 = vector.shape_cast %107 : vector<1x2x128xf32> to vector<2x128xf32>
    %109 = vector.broadcast %106 : f32 to vector<2x128xf32>
    %110 = arith.mulf %109, %108 : vector<2x128xf32>
    %111 = arith.addf %105, %110 : vector<2x128xf32>
    %c1_40 = arith.constant 1 : index
    %112 = memref.load %arg5[%c1_40] : memref<8xf32, #tpu.memory_space<smem>>
    %cst_41 = arith.constant 0.000000e+00 : f32
    %113 = vector.broadcast %cst_41 : f32 to vector<2x128xf32>
    %114 = arith.maximumf %111, %113 : vector<2x128xf32>
    %115 = vector.broadcast %112 : f32 to vector<2x128xf32>
    %116 = arith.mulf %115, %114 : vector<2x128xf32>
    %117 = arith.addf %61, %116 : vector<2x128xf32>
    %c2_42 = arith.constant 2 : index
    %118 = memref.load %arg4[%c2_42] : memref<8xf32, #tpu.memory_space<smem>>
    %119 = vector.broadcast %118 : f32 to vector<2x128xf32>
    %c2_43 = arith.constant 2 : index
    %c0_44 = arith.constant 0 : index
    %120 = memref.load %arg2[%c2_43, %c0_44] : memref<8x4xf32, #tpu.memory_space<smem>>
    %121 = vector.extract_strided_slice %1 {offsets = [0, 0, 0], sizes = [1, 2, 128], strides = [1, 1, 1]} : vector<4x2x128xf32> to vector<1x2x128xf32>
    %122 = vector.shape_cast %121 : vector<1x2x128xf32> to vector<2x128xf32>
    %123 = vector.broadcast %120 : f32 to vector<2x128xf32>
    %124 = arith.mulf %123, %122 : vector<2x128xf32>
    %125 = arith.addf %119, %124 : vector<2x128xf32>
    %c2_45 = arith.constant 2 : index
    %c1_46 = arith.constant 1 : index
    %126 = memref.load %arg2[%c2_45, %c1_46] : memref<8x4xf32, #tpu.memory_space<smem>>
    %127 = vector.extract_strided_slice %1 {offsets = [1, 0, 0], sizes = [1, 2, 128], strides = [1, 1, 1]} : vector<4x2x128xf32> to vector<1x2x128xf32>
    %128 = vector.shape_cast %127 : vector<1x2x128xf32> to vector<2x128xf32>
    %129 = vector.broadcast %126 : f32 to vector<2x128xf32>
    %130 = arith.mulf %129, %128 : vector<2x128xf32>
    %131 = arith.addf %125, %130 : vector<2x128xf32>
    %c2_47 = arith.constant 2 : index
    %c2_48 = arith.constant 2 : index
    %132 = memref.load %arg2[%c2_47, %c2_48] : memref<8x4xf32, #tpu.memory_space<smem>>
    %133 = vector.extract_strided_slice %1 {offsets = [2, 0, 0], sizes = [1, 2, 128], strides = [1, 1, 1]} : vector<4x2x128xf32> to vector<1x2x128xf32>
    %134 = vector.shape_cast %133 : vector<1x2x128xf32> to vector<2x128xf32>
    %135 = vector.broadcast %132 : f32 to vector<2x128xf32>
    %136 = arith.mulf %135, %134 : vector<2x128xf32>
    %137 = arith.addf %131, %136 : vector<2x128xf32>
    %c2_49 = arith.constant 2 : index
    %c3_50 = arith.constant 3 : index
    %138 = memref.load %arg2[%c2_49, %c3_50] : memref<8x4xf32, #tpu.memory_space<smem>>
    %139 = vector.extract_strided_slice %1 {offsets = [3, 0, 0], sizes = [1, 2, 128], strides = [1, 1, 1]} : vector<4x2x128xf32> to vector<1x2x128xf32>
    %140 = vector.shape_cast %139 : vector<1x2x128xf32> to vector<2x128xf32>
    %141 = vector.broadcast %138 : f32 to vector<2x128xf32>
    %142 = arith.mulf %141, %140 : vector<2x128xf32>
    %143 = arith.addf %137, %142 : vector<2x128xf32>
    %c2_51 = arith.constant 2 : index
    %c0_52 = arith.constant 0 : index
    %144 = memref.load %arg3[%c2_51, %c0_52] : memref<8x4xf32, #tpu.memory_space<smem>>
    %145 = vector.extract_strided_slice %3 {offsets = [0, 0, 0], sizes = [1, 2, 128], strides = [1, 1, 1]} : vector<4x2x128xf32> to vector<1x2x128xf32>
    %146 = vector.shape_cast %145 : vector<1x2x128xf32> to vector<2x128xf32>
    %147 = vector.broadcast %144 : f32 to vector<2x128xf32>
    %148 = arith.mulf %147, %146 : vector<2x128xf32>
    %149 = arith.addf %143, %148 : vector<2x128xf32>
    %c2_53 = arith.constant 2 : index
    %c1_54 = arith.constant 1 : index
    %150 = memref.load %arg3[%c2_53, %c1_54] : memref<8x4xf32, #tpu.memory_space<smem>>
    %151 = vector.extract_strided_slice %3 {offsets = [1, 0, 0], sizes = [1, 2, 128], strides = [1, 1, 1]} : vector<4x2x128xf32> to vector<1x2x128xf32>
    %152 = vector.shape_cast %151 : vector<1x2x128xf32> to vector<2x128xf32>
    %153 = vector.broadcast %150 : f32 to vector<2x128xf32>
    %154 = arith.mulf %153, %152 : vector<2x128xf32>
    %155 = arith.addf %149, %154 : vector<2x128xf32>
    %c2_55 = arith.constant 2 : index
    %c2_56 = arith.constant 2 : index
    %156 = memref.load %arg3[%c2_55, %c2_56] : memref<8x4xf32, #tpu.memory_space<smem>>
    %157 = vector.extract_strided_slice %3 {offsets = [2, 0, 0], sizes = [1, 2, 128], strides = [1, 1, 1]} : vector<4x2x128xf32> to vector<1x2x128xf32>
    %158 = vector.shape_cast %157 : vector<1x2x128xf32> to vector<2x128xf32>
    %159 = vector.broadcast %156 : f32 to vector<2x128xf32>
    %160 = arith.mulf %159, %158 : vector<2x128xf32>
    %161 = arith.addf %155, %160 : vector<2x128xf32>
    %c2_57 = arith.constant 2 : index
    %c3_58 = arith.constant 3 : index
    %162 = memref.load %arg3[%c2_57, %c3_58] : memref<8x4xf32, #tpu.memory_space<smem>>
    %163 = vector.extract_strided_slice %3 {offsets = [3, 0, 0], sizes = [1, 2, 128], strides = [1, 1, 1]} : vector<4x2x128xf32> to vector<1x2x128xf32>
    %164 = vector.shape_cast %163 : vector<1x2x128xf32> to vector<2x128xf32>
    %165 = vector.broadcast %162 : f32 to vector<2x128xf32>
    %166 = arith.mulf %165, %164 : vector<2x128xf32>
    %167 = arith.addf %161, %166 : vector<2x128xf32>
    %c2_59 = arith.constant 2 : index
    %168 = memref.load %arg5[%c2_59] : memref<8xf32, #tpu.memory_space<smem>>
    %cst_60 = arith.constant 0.000000e+00 : f32
    %169 = vector.broadcast %cst_60 : f32 to vector<2x128xf32>
    %170 = arith.maximumf %167, %169 : vector<2x128xf32>
    %171 = vector.broadcast %168 : f32 to vector<2x128xf32>
    %172 = arith.mulf %171, %170 : vector<2x128xf32>
    %173 = arith.addf %117, %172 : vector<2x128xf32>
    %c3_61 = arith.constant 3 : index
    %174 = memref.load %arg4[%c3_61] : memref<8xf32, #tpu.memory_space<smem>>
    %175 = vector.broadcast %174 : f32 to vector<2x128xf32>
    %c3_62 = arith.constant 3 : index
    %c0_63 = arith.constant 0 : index
    %176 = memref.load %arg2[%c3_62, %c0_63] : memref<8x4xf32, #tpu.memory_space<smem>>
    %177 = vector.extract_strided_slice %1 {offsets = [0, 0, 0], sizes = [1, 2, 128], strides = [1, 1, 1]} : vector<4x2x128xf32> to vector<1x2x128xf32>
    %178 = vector.shape_cast %177 : vector<1x2x128xf32> to vector<2x128xf32>
    %179 = vector.broadcast %176 : f32 to vector<2x128xf32>
    %180 = arith.mulf %179, %178 : vector<2x128xf32>
    %181 = arith.addf %175, %180 : vector<2x128xf32>
    %c3_64 = arith.constant 3 : index
    %c1_65 = arith.constant 1 : index
    %182 = memref.load %arg2[%c3_64, %c1_65] : memref<8x4xf32, #tpu.memory_space<smem>>
    %183 = vector.extract_strided_slice %1 {offsets = [1, 0, 0], sizes = [1, 2, 128], strides = [1, 1, 1]} : vector<4x2x128xf32> to vector<1x2x128xf32>
    %184 = vector.shape_cast %183 : vector<1x2x128xf32> to vector<2x128xf32>
    %185 = vector.broadcast %182 : f32 to vector<2x128xf32>
    %186 = arith.mulf %185, %184 : vector<2x128xf32>
    %187 = arith.addf %181, %186 : vector<2x128xf32>
    %c3_66 = arith.constant 3 : index
    %c2_67 = arith.constant 2 : index
    %188 = memref.load %arg2[%c3_66, %c2_67] : memref<8x4xf32, #tpu.memory_space<smem>>
    %189 = vector.extract_strided_slice %1 {offsets = [2, 0, 0], sizes = [1, 2, 128], strides = [1, 1, 1]} : vector<4x2x128xf32> to vector<1x2x128xf32>
    %190 = vector.shape_cast %189 : vector<1x2x128xf32> to vector<2x128xf32>
    %191 = vector.broadcast %188 : f32 to vector<2x128xf32>
    %192 = arith.mulf %191, %190 : vector<2x128xf32>
    %193 = arith.addf %187, %192 : vector<2x128xf32>
    %c3_68 = arith.constant 3 : index
    %c3_69 = arith.constant 3 : index
    %194 = memref.load %arg2[%c3_68, %c3_69] : memref<8x4xf32, #tpu.memory_space<smem>>
    %195 = vector.extract_strided_slice %1 {offsets = [3, 0, 0], sizes = [1, 2, 128], strides = [1, 1, 1]} : vector<4x2x128xf32> to vector<1x2x128xf32>
    %196 = vector.shape_cast %195 : vector<1x2x128xf32> to vector<2x128xf32>
    %197 = vector.broadcast %194 : f32 to vector<2x128xf32>
    %198 = arith.mulf %197, %196 : vector<2x128xf32>
    %199 = arith.addf %193, %198 : vector<2x128xf32>
    %c3_70 = arith.constant 3 : index
    %c0_71 = arith.constant 0 : index
    %200 = memref.load %arg3[%c3_70, %c0_71] : memref<8x4xf32, #tpu.memory_space<smem>>
    %201 = vector.extract_strided_slice %3 {offsets = [0, 0, 0], sizes = [1, 2, 128], strides = [1, 1, 1]} : vector<4x2x128xf32> to vector<1x2x128xf32>
    %202 = vector.shape_cast %201 : vector<1x2x128xf32> to vector<2x128xf32>
    %203 = vector.broadcast %200 : f32 to vector<2x128xf32>
    %204 = arith.mulf %203, %202 : vector<2x128xf32>
    %205 = arith.addf %199, %204 : vector<2x128xf32>
    %c3_72 = arith.constant 3 : index
    %c1_73 = arith.constant 1 : index
    %206 = memref.load %arg3[%c3_72, %c1_73] : memref<8x4xf32, #tpu.memory_space<smem>>
    %207 = vector.extract_strided_slice %3 {offsets = [1, 0, 0], sizes = [1, 2, 128], strides = [1, 1, 1]} : vector<4x2x128xf32> to vector<1x2x128xf32>
    %208 = vector.shape_cast %207 : vector<1x2x128xf32> to vector<2x128xf32>
    %209 = vector.broadcast %206 : f32 to vector<2x128xf32>
    %210 = arith.mulf %209, %208 : vector<2x128xf32>
    %211 = arith.addf %205, %210 : vector<2x128xf32>
    %c3_74 = arith.constant 3 : index
    %c2_75 = arith.constant 2 : index
    %212 = memref.load %arg3[%c3_74, %c2_75] : memref<8x4xf32, #tpu.memory_space<smem>>
    %213 = vector.extract_strided_slice %3 {offsets = [2, 0, 0], sizes = [1, 2, 128], strides = [1, 1, 1]} : vector<4x2x128xf32> to vector<1x2x128xf32>
    %214 = vector.shape_cast %213 : vector<1x2x128xf32> to vector<2x128xf32>
    %215 = vector.broadcast %212 : f32 to vector<2x128xf32>
    %216 = arith.mulf %215, %214 : vector<2x128xf32>
    %217 = arith.addf %211, %216 : vector<2x128xf32>
    %c3_76 = arith.constant 3 : index
    %c3_77 = arith.constant 3 : index
    %218 = memref.load %arg3[%c3_76, %c3_77] : memref<8x4xf32, #tpu.memory_space<smem>>
    %219 = vector.extract_strided_slice %3 {offsets = [3, 0, 0], sizes = [1, 2, 128], strides = [1, 1, 1]} : vector<4x2x128xf32> to vector<1x2x128xf32>
    %220 = vector.shape_cast %219 : vector<1x2x128xf32> to vector<2x128xf32>
    %221 = vector.broadcast %218 : f32 to vector<2x128xf32>
    %222 = arith.mulf %221, %220 : vector<2x128xf32>
    %223 = arith.addf %217, %222 : vector<2x128xf32>
    %c3_78 = arith.constant 3 : index
    %224 = memref.load %arg5[%c3_78] : memref<8xf32, #tpu.memory_space<smem>>
    %cst_79 = arith.constant 0.000000e+00 : f32
    %225 = vector.broadcast %cst_79 : f32 to vector<2x128xf32>
    %226 = arith.maximumf %223, %225 : vector<2x128xf32>
    %227 = vector.broadcast %224 : f32 to vector<2x128xf32>
    %228 = arith.mulf %227, %226 : vector<2x128xf32>
    %229 = arith.addf %173, %228 : vector<2x128xf32>
    %c4 = arith.constant 4 : index
    %230 = memref.load %arg4[%c4] : memref<8xf32, #tpu.memory_space<smem>>
    %231 = vector.broadcast %230 : f32 to vector<2x128xf32>
    %c4_80 = arith.constant 4 : index
    %c0_81 = arith.constant 0 : index
    %232 = memref.load %arg2[%c4_80, %c0_81] : memref<8x4xf32, #tpu.memory_space<smem>>
    %233 = vector.extract_strided_slice %1 {offsets = [0, 0, 0], sizes = [1, 2, 128], strides = [1, 1, 1]} : vector<4x2x128xf32> to vector<1x2x128xf32>
    %234 = vector.shape_cast %233 : vector<1x2x128xf32> to vector<2x128xf32>
    %235 = vector.broadcast %232 : f32 to vector<2x128xf32>
    %236 = arith.mulf %235, %234 : vector<2x128xf32>
    %237 = arith.addf %231, %236 : vector<2x128xf32>
    %c4_82 = arith.constant 4 : index
    %c1_83 = arith.constant 1 : index
    %238 = memref.load %arg2[%c4_82, %c1_83] : memref<8x4xf32, #tpu.memory_space<smem>>
    %239 = vector.extract_strided_slice %1 {offsets = [1, 0, 0], sizes = [1, 2, 128], strides = [1, 1, 1]} : vector<4x2x128xf32> to vector<1x2x128xf32>
    %240 = vector.shape_cast %239 : vector<1x2x128xf32> to vector<2x128xf32>
    %241 = vector.broadcast %238 : f32 to vector<2x128xf32>
    %242 = arith.mulf %241, %240 : vector<2x128xf32>
    %243 = arith.addf %237, %242 : vector<2x128xf32>
    %c4_84 = arith.constant 4 : index
    %c2_85 = arith.constant 2 : index
    %244 = memref.load %arg2[%c4_84, %c2_85] : memref<8x4xf32, #tpu.memory_space<smem>>
    %245 = vector.extract_strided_slice %1 {offsets = [2, 0, 0], sizes = [1, 2, 128], strides = [1, 1, 1]} : vector<4x2x128xf32> to vector<1x2x128xf32>
    %246 = vector.shape_cast %245 : vector<1x2x128xf32> to vector<2x128xf32>
    %247 = vector.broadcast %244 : f32 to vector<2x128xf32>
    %248 = arith.mulf %247, %246 : vector<2x128xf32>
    %249 = arith.addf %243, %248 : vector<2x128xf32>
    %c4_86 = arith.constant 4 : index
    %c3_87 = arith.constant 3 : index
    %250 = memref.load %arg2[%c4_86, %c3_87] : memref<8x4xf32, #tpu.memory_space<smem>>
    %251 = vector.extract_strided_slice %1 {offsets = [3, 0, 0], sizes = [1, 2, 128], strides = [1, 1, 1]} : vector<4x2x128xf32> to vector<1x2x128xf32>
    %252 = vector.shape_cast %251 : vector<1x2x128xf32> to vector<2x128xf32>
    %253 = vector.broadcast %250 : f32 to vector<2x128xf32>
    %254 = arith.mulf %253, %252 : vector<2x128xf32>
    %255 = arith.addf %249, %254 : vector<2x128xf32>
    %c4_88 = arith.constant 4 : index
    %c0_89 = arith.constant 0 : index
    %256 = memref.load %arg3[%c4_88, %c0_89] : memref<8x4xf32, #tpu.memory_space<smem>>
    %257 = vector.extract_strided_slice %3 {offsets = [0, 0, 0], sizes = [1, 2, 128], strides = [1, 1, 1]} : vector<4x2x128xf32> to vector<1x2x128xf32>
    %258 = vector.shape_cast %257 : vector<1x2x128xf32> to vector<2x128xf32>
    %259 = vector.broadcast %256 : f32 to vector<2x128xf32>
    %260 = arith.mulf %259, %258 : vector<2x128xf32>
    %261 = arith.addf %255, %260 : vector<2x128xf32>
    %c4_90 = arith.constant 4 : index
    %c1_91 = arith.constant 1 : index
    %262 = memref.load %arg3[%c4_90, %c1_91] : memref<8x4xf32, #tpu.memory_space<smem>>
    %263 = vector.extract_strided_slice %3 {offsets = [1, 0, 0], sizes = [1, 2, 128], strides = [1, 1, 1]} : vector<4x2x128xf32> to vector<1x2x128xf32>
    %264 = vector.shape_cast %263 : vector<1x2x128xf32> to vector<2x128xf32>
    %265 = vector.broadcast %262 : f32 to vector<2x128xf32>
    %266 = arith.mulf %265, %264 : vector<2x128xf32>
    %267 = arith.addf %261, %266 : vector<2x128xf32>
    %c4_92 = arith.constant 4 : index
    %c2_93 = arith.constant 2 : index
    %268 = memref.load %arg3[%c4_92, %c2_93] : memref<8x4xf32, #tpu.memory_space<smem>>
    %269 = vector.extract_strided_slice %3 {offsets = [2, 0, 0], sizes = [1, 2, 128], strides = [1, 1, 1]} : vector<4x2x128xf32> to vector<1x2x128xf32>
    %270 = vector.shape_cast %269 : vector<1x2x128xf32> to vector<2x128xf32>
    %271 = vector.broadcast %268 : f32 to vector<2x128xf32>
    %272 = arith.mulf %271, %270 : vector<2x128xf32>
    %273 = arith.addf %267, %272 : vector<2x128xf32>
    %c4_94 = arith.constant 4 : index
    %c3_95 = arith.constant 3 : index
    %274 = memref.load %arg3[%c4_94, %c3_95] : memref<8x4xf32, #tpu.memory_space<smem>>
    %275 = vector.extract_strided_slice %3 {offsets = [3, 0, 0], sizes = [1, 2, 128], strides = [1, 1, 1]} : vector<4x2x128xf32> to vector<1x2x128xf32>
    %276 = vector.shape_cast %275 : vector<1x2x128xf32> to vector<2x128xf32>
    %277 = vector.broadcast %274 : f32 to vector<2x128xf32>
    %278 = arith.mulf %277, %276 : vector<2x128xf32>
    %279 = arith.addf %273, %278 : vector<2x128xf32>
    %c4_96 = arith.constant 4 : index
    %280 = memref.load %arg5[%c4_96] : memref<8xf32, #tpu.memory_space<smem>>
    %cst_97 = arith.constant 0.000000e+00 : f32
    %281 = vector.broadcast %cst_97 : f32 to vector<2x128xf32>
    %282 = arith.maximumf %279, %281 : vector<2x128xf32>
    %283 = vector.broadcast %280 : f32 to vector<2x128xf32>
    %284 = arith.mulf %283, %282 : vector<2x128xf32>
    %285 = arith.addf %229, %284 : vector<2x128xf32>
    %c5 = arith.constant 5 : index
    %286 = memref.load %arg4[%c5] : memref<8xf32, #tpu.memory_space<smem>>
    %287 = vector.broadcast %286 : f32 to vector<2x128xf32>
    %c5_98 = arith.constant 5 : index
    %c0_99 = arith.constant 0 : index
    %288 = memref.load %arg2[%c5_98, %c0_99] : memref<8x4xf32, #tpu.memory_space<smem>>
    %289 = vector.extract_strided_slice %1 {offsets = [0, 0, 0], sizes = [1, 2, 128], strides = [1, 1, 1]} : vector<4x2x128xf32> to vector<1x2x128xf32>
    %290 = vector.shape_cast %289 : vector<1x2x128xf32> to vector<2x128xf32>
    %291 = vector.broadcast %288 : f32 to vector<2x128xf32>
    %292 = arith.mulf %291, %290 : vector<2x128xf32>
    %293 = arith.addf %287, %292 : vector<2x128xf32>
    %c5_100 = arith.constant 5 : index
    %c1_101 = arith.constant 1 : index
    %294 = memref.load %arg2[%c5_100, %c1_101] : memref<8x4xf32, #tpu.memory_space<smem>>
    %295 = vector.extract_strided_slice %1 {offsets = [1, 0, 0], sizes = [1, 2, 128], strides = [1, 1, 1]} : vector<4x2x128xf32> to vector<1x2x128xf32>
    %296 = vector.shape_cast %295 : vector<1x2x128xf32> to vector<2x128xf32>
    %297 = vector.broadcast %294 : f32 to vector<2x128xf32>
    %298 = arith.mulf %297, %296 : vector<2x128xf32>
    %299 = arith.addf %293, %298 : vector<2x128xf32>
    %c5_102 = arith.constant 5 : index
    %c2_103 = arith.constant 2 : index
    %300 = memref.load %arg2[%c5_102, %c2_103] : memref<8x4xf32, #tpu.memory_space<smem>>
    %301 = vector.extract_strided_slice %1 {offsets = [2, 0, 0], sizes = [1, 2, 128], strides = [1, 1, 1]} : vector<4x2x128xf32> to vector<1x2x128xf32>
    %302 = vector.shape_cast %301 : vector<1x2x128xf32> to vector<2x128xf32>
    %303 = vector.broadcast %300 : f32 to vector<2x128xf32>
    %304 = arith.mulf %303, %302 : vector<2x128xf32>
    %305 = arith.addf %299, %304 : vector<2x128xf32>
    %c5_104 = arith.constant 5 : index
    %c3_105 = arith.constant 3 : index
    %306 = memref.load %arg2[%c5_104, %c3_105] : memref<8x4xf32, #tpu.memory_space<smem>>
    %307 = vector.extract_strided_slice %1 {offsets = [3, 0, 0], sizes = [1, 2, 128], strides = [1, 1, 1]} : vector<4x2x128xf32> to vector<1x2x128xf32>
    %308 = vector.shape_cast %307 : vector<1x2x128xf32> to vector<2x128xf32>
    %309 = vector.broadcast %306 : f32 to vector<2x128xf32>
    %310 = arith.mulf %309, %308 : vector<2x128xf32>
    %311 = arith.addf %305, %310 : vector<2x128xf32>
    %c5_106 = arith.constant 5 : index
    %c0_107 = arith.constant 0 : index
    %312 = memref.load %arg3[%c5_106, %c0_107] : memref<8x4xf32, #tpu.memory_space<smem>>
    %313 = vector.extract_strided_slice %3 {offsets = [0, 0, 0], sizes = [1, 2, 128], strides = [1, 1, 1]} : vector<4x2x128xf32> to vector<1x2x128xf32>
    %314 = vector.shape_cast %313 : vector<1x2x128xf32> to vector<2x128xf32>
    %315 = vector.broadcast %312 : f32 to vector<2x128xf32>
    %316 = arith.mulf %315, %314 : vector<2x128xf32>
    %317 = arith.addf %311, %316 : vector<2x128xf32>
    %c5_108 = arith.constant 5 : index
    %c1_109 = arith.constant 1 : index
    %318 = memref.load %arg3[%c5_108, %c1_109] : memref<8x4xf32, #tpu.memory_space<smem>>
    %319 = vector.extract_strided_slice %3 {offsets = [1, 0, 0], sizes = [1, 2, 128], strides = [1, 1, 1]} : vector<4x2x128xf32> to vector<1x2x128xf32>
    %320 = vector.shape_cast %319 : vector<1x2x128xf32> to vector<2x128xf32>
    %321 = vector.broadcast %318 : f32 to vector<2x128xf32>
    %322 = arith.mulf %321, %320 : vector<2x128xf32>
    %323 = arith.addf %317, %322 : vector<2x128xf32>
    %c5_110 = arith.constant 5 : index
    %c2_111 = arith.constant 2 : index
    %324 = memref.load %arg3[%c5_110, %c2_111] : memref<8x4xf32, #tpu.memory_space<smem>>
    %325 = vector.extract_strided_slice %3 {offsets = [2, 0, 0], sizes = [1, 2, 128], strides = [1, 1, 1]} : vector<4x2x128xf32> to vector<1x2x128xf32>
    %326 = vector.shape_cast %325 : vector<1x2x128xf32> to vector<2x128xf32>
    %327 = vector.broadcast %324 : f32 to vector<2x128xf32>
    %328 = arith.mulf %327, %326 : vector<2x128xf32>
    %329 = arith.addf %323, %328 : vector<2x128xf32>
    %c5_112 = arith.constant 5 : index
    %c3_113 = arith.constant 3 : index
    %330 = memref.load %arg3[%c5_112, %c3_113] : memref<8x4xf32, #tpu.memory_space<smem>>
    %331 = vector.extract_strided_slice %3 {offsets = [3, 0, 0], sizes = [1, 2, 128], strides = [1, 1, 1]} : vector<4x2x128xf32> to vector<1x2x128xf32>
    %332 = vector.shape_cast %331 : vector<1x2x128xf32> to vector<2x128xf32>
    %333 = vector.broadcast %330 : f32 to vector<2x128xf32>
    %334 = arith.mulf %333, %332 : vector<2x128xf32>
    %335 = arith.addf %329, %334 : vector<2x128xf32>
    %c5_114 = arith.constant 5 : index
    %336 = memref.load %arg5[%c5_114] : memref<8xf32, #tpu.memory_space<smem>>
    %cst_115 = arith.constant 0.000000e+00 : f32
    %337 = vector.broadcast %cst_115 : f32 to vector<2x128xf32>
    %338 = arith.maximumf %335, %337 : vector<2x128xf32>
    %339 = vector.broadcast %336 : f32 to vector<2x128xf32>
    %340 = arith.mulf %339, %338 : vector<2x128xf32>
    %341 = arith.addf %285, %340 : vector<2x128xf32>
    %c6 = arith.constant 6 : index
    %342 = memref.load %arg4[%c6] : memref<8xf32, #tpu.memory_space<smem>>
    %343 = vector.broadcast %342 : f32 to vector<2x128xf32>
    %c6_116 = arith.constant 6 : index
    %c0_117 = arith.constant 0 : index
    %344 = memref.load %arg2[%c6_116, %c0_117] : memref<8x4xf32, #tpu.memory_space<smem>>
    %345 = vector.extract_strided_slice %1 {offsets = [0, 0, 0], sizes = [1, 2, 128], strides = [1, 1, 1]} : vector<4x2x128xf32> to vector<1x2x128xf32>
    %346 = vector.shape_cast %345 : vector<1x2x128xf32> to vector<2x128xf32>
    %347 = vector.broadcast %344 : f32 to vector<2x128xf32>
    %348 = arith.mulf %347, %346 : vector<2x128xf32>
    %349 = arith.addf %343, %348 : vector<2x128xf32>
    %c6_118 = arith.constant 6 : index
    %c1_119 = arith.constant 1 : index
    %350 = memref.load %arg2[%c6_118, %c1_119] : memref<8x4xf32, #tpu.memory_space<smem>>
    %351 = vector.extract_strided_slice %1 {offsets = [1, 0, 0], sizes = [1, 2, 128], strides = [1, 1, 1]} : vector<4x2x128xf32> to vector<1x2x128xf32>
    %352 = vector.shape_cast %351 : vector<1x2x128xf32> to vector<2x128xf32>
    %353 = vector.broadcast %350 : f32 to vector<2x128xf32>
    %354 = arith.mulf %353, %352 : vector<2x128xf32>
    %355 = arith.addf %349, %354 : vector<2x128xf32>
    %c6_120 = arith.constant 6 : index
    %c2_121 = arith.constant 2 : index
    %356 = memref.load %arg2[%c6_120, %c2_121] : memref<8x4xf32, #tpu.memory_space<smem>>
    %357 = vector.extract_strided_slice %1 {offsets = [2, 0, 0], sizes = [1, 2, 128], strides = [1, 1, 1]} : vector<4x2x128xf32> to vector<1x2x128xf32>
    %358 = vector.shape_cast %357 : vector<1x2x128xf32> to vector<2x128xf32>
    %359 = vector.broadcast %356 : f32 to vector<2x128xf32>
    %360 = arith.mulf %359, %358 : vector<2x128xf32>
    %361 = arith.addf %355, %360 : vector<2x128xf32>
    %c6_122 = arith.constant 6 : index
    %c3_123 = arith.constant 3 : index
    %362 = memref.load %arg2[%c6_122, %c3_123] : memref<8x4xf32, #tpu.memory_space<smem>>
    %363 = vector.extract_strided_slice %1 {offsets = [3, 0, 0], sizes = [1, 2, 128], strides = [1, 1, 1]} : vector<4x2x128xf32> to vector<1x2x128xf32>
    %364 = vector.shape_cast %363 : vector<1x2x128xf32> to vector<2x128xf32>
    %365 = vector.broadcast %362 : f32 to vector<2x128xf32>
    %366 = arith.mulf %365, %364 : vector<2x128xf32>
    %367 = arith.addf %361, %366 : vector<2x128xf32>
    %c6_124 = arith.constant 6 : index
    %c0_125 = arith.constant 0 : index
    %368 = memref.load %arg3[%c6_124, %c0_125] : memref<8x4xf32, #tpu.memory_space<smem>>
    %369 = vector.extract_strided_slice %3 {offsets = [0, 0, 0], sizes = [1, 2, 128], strides = [1, 1, 1]} : vector<4x2x128xf32> to vector<1x2x128xf32>
    %370 = vector.shape_cast %369 : vector<1x2x128xf32> to vector<2x128xf32>
    %371 = vector.broadcast %368 : f32 to vector<2x128xf32>
    %372 = arith.mulf %371, %370 : vector<2x128xf32>
    %373 = arith.addf %367, %372 : vector<2x128xf32>
    %c6_126 = arith.constant 6 : index
    %c1_127 = arith.constant 1 : index
    %374 = memref.load %arg3[%c6_126, %c1_127] : memref<8x4xf32, #tpu.memory_space<smem>>
    %375 = vector.extract_strided_slice %3 {offsets = [1, 0, 0], sizes = [1, 2, 128], strides = [1, 1, 1]} : vector<4x2x128xf32> to vector<1x2x128xf32>
    %376 = vector.shape_cast %375 : vector<1x2x128xf32> to vector<2x128xf32>
    %377 = vector.broadcast %374 : f32 to vector<2x128xf32>
    %378 = arith.mulf %377, %376 : vector<2x128xf32>
    %379 = arith.addf %373, %378 : vector<2x128xf32>
    %c6_128 = arith.constant 6 : index
    %c2_129 = arith.constant 2 : index
    %380 = memref.load %arg3[%c6_128, %c2_129] : memref<8x4xf32, #tpu.memory_space<smem>>
    %381 = vector.extract_strided_slice %3 {offsets = [2, 0, 0], sizes = [1, 2, 128], strides = [1, 1, 1]} : vector<4x2x128xf32> to vector<1x2x128xf32>
    %382 = vector.shape_cast %381 : vector<1x2x128xf32> to vector<2x128xf32>
    %383 = vector.broadcast %380 : f32 to vector<2x128xf32>
    %384 = arith.mulf %383, %382 : vector<2x128xf32>
    %385 = arith.addf %379, %384 : vector<2x128xf32>
    %c6_130 = arith.constant 6 : index
    %c3_131 = arith.constant 3 : index
    %386 = memref.load %arg3[%c6_130, %c3_131] : memref<8x4xf32, #tpu.memory_space<smem>>
    %387 = vector.extract_strided_slice %3 {offsets = [3, 0, 0], sizes = [1, 2, 128], strides = [1, 1, 1]} : vector<4x2x128xf32> to vector<1x2x128xf32>
    %388 = vector.shape_cast %387 : vector<1x2x128xf32> to vector<2x128xf32>
    %389 = vector.broadcast %386 : f32 to vector<2x128xf32>
    %390 = arith.mulf %389, %388 : vector<2x128xf32>
    %391 = arith.addf %385, %390 : vector<2x128xf32>
    %c6_132 = arith.constant 6 : index
    %392 = memref.load %arg5[%c6_132] : memref<8xf32, #tpu.memory_space<smem>>
    %cst_133 = arith.constant 0.000000e+00 : f32
    %393 = vector.broadcast %cst_133 : f32 to vector<2x128xf32>
    %394 = arith.maximumf %391, %393 : vector<2x128xf32>
    %395 = vector.broadcast %392 : f32 to vector<2x128xf32>
    %396 = arith.mulf %395, %394 : vector<2x128xf32>
    %397 = arith.addf %341, %396 : vector<2x128xf32>
    %c7 = arith.constant 7 : index
    %398 = memref.load %arg4[%c7] : memref<8xf32, #tpu.memory_space<smem>>
    %399 = vector.broadcast %398 : f32 to vector<2x128xf32>
    %c7_134 = arith.constant 7 : index
    %c0_135 = arith.constant 0 : index
    %400 = memref.load %arg2[%c7_134, %c0_135] : memref<8x4xf32, #tpu.memory_space<smem>>
    %401 = vector.extract_strided_slice %1 {offsets = [0, 0, 0], sizes = [1, 2, 128], strides = [1, 1, 1]} : vector<4x2x128xf32> to vector<1x2x128xf32>
    %402 = vector.shape_cast %401 : vector<1x2x128xf32> to vector<2x128xf32>
    %403 = vector.broadcast %400 : f32 to vector<2x128xf32>
    %404 = arith.mulf %403, %402 : vector<2x128xf32>
    %405 = arith.addf %399, %404 : vector<2x128xf32>
    %c7_136 = arith.constant 7 : index
    %c1_137 = arith.constant 1 : index
    %406 = memref.load %arg2[%c7_136, %c1_137] : memref<8x4xf32, #tpu.memory_space<smem>>
    %407 = vector.extract_strided_slice %1 {offsets = [1, 0, 0], sizes = [1, 2, 128], strides = [1, 1, 1]} : vector<4x2x128xf32> to vector<1x2x128xf32>
    %408 = vector.shape_cast %407 : vector<1x2x128xf32> to vector<2x128xf32>
    %409 = vector.broadcast %406 : f32 to vector<2x128xf32>
    %410 = arith.mulf %409, %408 : vector<2x128xf32>
    %411 = arith.addf %405, %410 : vector<2x128xf32>
    %c7_138 = arith.constant 7 : index
    %c2_139 = arith.constant 2 : index
    %412 = memref.load %arg2[%c7_138, %c2_139] : memref<8x4xf32, #tpu.memory_space<smem>>
    %413 = vector.extract_strided_slice %1 {offsets = [2, 0, 0], sizes = [1, 2, 128], strides = [1, 1, 1]} : vector<4x2x128xf32> to vector<1x2x128xf32>
    %414 = vector.shape_cast %413 : vector<1x2x128xf32> to vector<2x128xf32>
    %415 = vector.broadcast %412 : f32 to vector<2x128xf32>
    %416 = arith.mulf %415, %414 : vector<2x128xf32>
    %417 = arith.addf %411, %416 : vector<2x128xf32>
    %c7_140 = arith.constant 7 : index
    %c3_141 = arith.constant 3 : index
    %418 = memref.load %arg2[%c7_140, %c3_141] : memref<8x4xf32, #tpu.memory_space<smem>>
    %419 = vector.extract_strided_slice %1 {offsets = [3, 0, 0], sizes = [1, 2, 128], strides = [1, 1, 1]} : vector<4x2x128xf32> to vector<1x2x128xf32>
    %420 = vector.shape_cast %419 : vector<1x2x128xf32> to vector<2x128xf32>
    %421 = vector.broadcast %418 : f32 to vector<2x128xf32>
    %422 = arith.mulf %421, %420 : vector<2x128xf32>
    %423 = arith.addf %417, %422 : vector<2x128xf32>
    %c7_142 = arith.constant 7 : index
    %c0_143 = arith.constant 0 : index
    %424 = memref.load %arg3[%c7_142, %c0_143] : memref<8x4xf32, #tpu.memory_space<smem>>
    %425 = vector.extract_strided_slice %3 {offsets = [0, 0, 0], sizes = [1, 2, 128], strides = [1, 1, 1]} : vector<4x2x128xf32> to vector<1x2x128xf32>
    %426 = vector.shape_cast %425 : vector<1x2x128xf32> to vector<2x128xf32>
    %427 = vector.broadcast %424 : f32 to vector<2x128xf32>
    %428 = arith.mulf %427, %426 : vector<2x128xf32>
    %429 = arith.addf %423, %428 : vector<2x128xf32>
    %c7_144 = arith.constant 7 : index
    %c1_145 = arith.constant 1 : index
    %430 = memref.load %arg3[%c7_144, %c1_145] : memref<8x4xf32, #tpu.memory_space<smem>>
    %431 = vector.extract_strided_slice %3 {offsets = [1, 0, 0], sizes = [1, 2, 128], strides = [1, 1, 1]} : vector<4x2x128xf32> to vector<1x2x128xf32>
    %432 = vector.shape_cast %431 : vector<1x2x128xf32> to vector<2x128xf32>
    %433 = vector.broadcast %430 : f32 to vector<2x128xf32>
    %434 = arith.mulf %433, %432 : vector<2x128xf32>
    %435 = arith.addf %429, %434 : vector<2x128xf32>
    %c7_146 = arith.constant 7 : index
    %c2_147 = arith.constant 2 : index
    %436 = memref.load %arg3[%c7_146, %c2_147] : memref<8x4xf32, #tpu.memory_space<smem>>
    %437 = vector.extract_strided_slice %3 {offsets = [2, 0, 0], sizes = [1, 2, 128], strides = [1, 1, 1]} : vector<4x2x128xf32> to vector<1x2x128xf32>
    %438 = vector.shape_cast %437 : vector<1x2x128xf32> to vector<2x128xf32>
    %439 = vector.broadcast %436 : f32 to vector<2x128xf32>
    %440 = arith.mulf %439, %438 : vector<2x128xf32>
    %441 = arith.addf %435, %440 : vector<2x128xf32>
    %c7_148 = arith.constant 7 : index
    %c3_149 = arith.constant 3 : index
    %442 = memref.load %arg3[%c7_148, %c3_149] : memref<8x4xf32, #tpu.memory_space<smem>>
    %443 = vector.extract_strided_slice %3 {offsets = [3, 0, 0], sizes = [1, 2, 128], strides = [1, 1, 1]} : vector<4x2x128xf32> to vector<1x2x128xf32>
    %444 = vector.shape_cast %443 : vector<1x2x128xf32> to vector<2x128xf32>
    %445 = vector.broadcast %442 : f32 to vector<2x128xf32>
    %446 = arith.mulf %445, %444 : vector<2x128xf32>
    %447 = arith.addf %441, %446 : vector<2x128xf32>
    %c7_150 = arith.constant 7 : index
    %448 = memref.load %arg5[%c7_150] : memref<8xf32, #tpu.memory_space<smem>>
    %cst_151 = arith.constant 0.000000e+00 : f32
    %449 = vector.broadcast %cst_151 : f32 to vector<2x128xf32>
    %450 = arith.maximumf %447, %449 : vector<2x128xf32>
    %451 = vector.broadcast %448 : f32 to vector<2x128xf32>
    %452 = arith.mulf %451, %450 : vector<2x128xf32>
    %453 = arith.addf %397, %452 : vector<2x128xf32>
    %454 = arith.negf %453 : vector<2x128xf32>
    %455 = math.exp %454 : vector<2x128xf32>
    %cst_152 = arith.constant 1.000000e+00 : f32
    %456 = vector.broadcast %cst_152 : f32 to vector<2x128xf32>
    %457 = arith.addf %456, %455 : vector<2x128xf32>
    %458 = arith.divf %456, %457 : vector<2x128xf32>
    %459 = vector.shape_cast %458 : vector<2x128xf32> to vector<1x2x128xf32>
    %460 = vector.broadcast %459 : vector<1x2x128xf32> to vector<4x2x128xf32>
    %461 = arith.mulf %460, %3 : vector<4x2x128xf32>
    %c0_153 = arith.constant 0 : index
    %c0_154 = arith.constant 0 : index
    %c0_155 = arith.constant 0 : index
    %c0_156 = arith.constant 0 : index
    %462 = vector.load %arg9[%c0_153, %c0_154, %c0_155, %c0_156] : memref<1x4x2x128xf32, #tpu.memory_space<vmem>>, vector<1x4x2x128xf32>
    %463 = vector.shape_cast %462 : vector<1x4x2x128xf32> to vector<4x2x128xf32>
    %464 = vector.shape_cast %461 : vector<4x2x128xf32> to vector<1x4x2x128xf32>
    tpu.vector_store %arg9[%c0_153, %c0_154, %c0_155, %c0_156], %464 {strides = array<i32>} : memref<1x4x2x128xf32, #tpu.memory_space<vmem>>, vector<1x4x2x128xf32>,
    return
  }
  func.func @transform_0(%arg0: i32, %arg1: i32) -> (i32, i32) {
    %c0_i32 = arith.constant 0 : i32
    %c0_i32_0 = arith.constant 0 : i32
    %c0_i32_1 = arith.constant 0 : i32
    return %c0_i32, %c0_i32_0 : i32, i32
  }
  func.func @transform_1(%arg0: i32, %arg1: i32) -> (i32, i32) {
    %c0_i32 = arith.constant 0 : i32
    %c0_i32_0 = arith.constant 0 : i32
    %c0_i32_1 = arith.constant 0 : i32
    return %c0_i32, %c0_i32_0 : i32, i32
  }
  func.func @transform_2(%arg0: i32, %arg1: i32) -> i32 {
    %c0_i32 = arith.constant 0 : i32
    %c0_i32_0 = arith.constant 0 : i32
    return %c0_i32 : i32
  }
  func.func @transform_3(%arg0: i32, %arg1: i32) -> i32 {
    %c0_i32 = arith.constant 0 : i32
    %c0_i32_0 = arith.constant 0 : i32
    return %c0_i32 : i32
  }
  func.func @transform_4(%arg0: i32, %arg1: i32) -> i32 {
    %c0_i32 = arith.constant 0 : i32
    %c0_i32_0 = arith.constant 0 : i32
    return %c0_i32 : i32
  }
  func.func @transform_5(%arg0: i32, %arg1: i32) -> (i32, i32, i32, i32) {
    %c0_i32 = arith.constant 0 : i32
    %c0_i32_0 = arith.constant 0 : i32
    %c0_i32_1 = arith.constant 0 : i32
    return %arg0, %c0_i32, %arg1, %c0_i32_0 : i32, i32, i32, i32
  }
  func.func @transform_6(%arg0: i32, %arg1: i32) -> (i32, i32, i32, i32) {
    %c0_i32 = arith.constant 0 : i32
    %c0_i32_0 = arith.constant 0 : i32
    %c0_i32_1 = arith.constant 0 : i32
    return %arg0, %c0_i32, %arg1, %c0_i32_0 : i32, i32, i32, i32
  }
  func.func @transform_7(%arg0: i32, %arg1: i32) -> (i32, i32, i32, i32) {
    %c0_i32 = arith.constant 0 : i32
    %c0_i32_0 = arith.constant 0 : i32
    %c0_i32_1 = arith.constant 0 : i32
    return %arg0, %c0_i32, %arg1, %c0_i32_0 : i32, i32, i32, i32
  }
}

</mosaic_0001>

<llo_original>
// kernel: attention_gate.1
$region0: #{attention_gate.1}
  #allocation0 [shape = 'u32[]', space=smem, size = 0x4, offset = 0x4, fixed_abs, tag = 'smem constant byte address 0x4 - core index']
  #allocation1 [shape = 'u32[144,128]{1,0:T(1,128)}', space=vmem, size = 0x12000, scoped, tag = 'internal scratch']
  #allocation2 [shape = 'f32[1]{0:T(128)S(6)}', space=smem, size = 0x200, scoped, tag = 'scoped memory for attention_gate.1']
  %s0 = inlined_call_operand.vmem [shape: f32[8,4], index: 0, kind: input, shape index: {}]
  %s1 = inlined_call_operand.vmem [shape: f32[8,4], index: 1, kind: input, shape index: {}]
  %s2 = inlined_call_operand.vmem [shape: f32[8], index: 2, kind: input, shape index: {}]
  %s3 = inlined_call_operand.vmem [shape: f32[8], index: 3, kind: input, shape index: {}]
  %s4 = inlined_call_operand.<no memory space> [shape: f32[1], index: 4, kind: input, shape index: {}]
  %s5 = inlined_call_operand.vmem [shape: f32[2,4,2,128], index: 5, kind: input, shape index: {}]
  %s6 = inlined_call_operand.vmem [shape: f32[2,4,2,128], index: 6, kind: input, shape index: {}]
  %s7 = inlined_call_operand.vmem [shape: f32[2,4,2,128], index: 7, kind: output, shape index: {}]
  %s8 = sld [smem:[#allocation0]]
  $region77: #{attention_gate.1} parent=0
    _
  %s10 = ssub.s32 1, %s8
  %s11 = scalar_select 0, %s10, %s8
  %12 = sst [smem:[#allocation2]] %s4
  $region1: #{attention_gate.1} parent=0
    #allocation3 [shape = 'u8[4096]{0}', space=smem, size = 0x1000, scoped, tag = 'input window, operand 0, single buffered']
    #allocation4 [shape = 's32[2]{0}', space=sflag, size = 0x8, scoped, tag = 'scoped memory for attention_gate.1']
    #allocation5 [shape = 'u8[4096]{0}', space=smem, size = 0x1000, scoped, tag = 'input window, operand 1, single buffered']
    #allocation6 [shape = 's32[1]{0}', space=sflag, size = 0x4, scoped, tag = 'scoped memory for attention_gate.1']
    #allocation7 [shape = 'u8[512]{0}', space=smem, size = 0x200, scoped, tag = 'input window, operand 2, single buffered']
    #allocation8 [shape = 'u8[512]{0}', space=smem, size = 0x200, scoped, tag = 'input window, operand 3, single buffered']
    #allocation9 [shape = 's32[1]{0}', space=sflag, size = 0x4, scoped, tag = 'scoped memory for attention_gate.1']
    %13 = vsyncpa [#allocation4], 0
    %14 = vsyncpa [#allocation6], 0
    %15 = vsyncpa [#allocation9], 0
    loop: start=0, step=1, limit=4
    $region2: #{attention_gate.1} parent=1 // loop_pre_header
      _
    $region3: #{attention_gate.1} parent=1 // loop_header
      %s17 = sphi 0, %s21
      %p18 = scmp.ge.s32.totalorder %s17, 4
      %s24 = sphi 0, %s36
      %s25 = sphi 0, %s32
      %s26 = sphi 0, %s24
      %s27 = sphi 0, %s25
      %s28 = sphi 0, %s26
      %s29 = sphi 0, %s27
      %s37 = sphi 0, %s37
      %s39 = sphi 0, %s37
      %s40 = sphi 0, %s39
      %s54 = sphi 0, %s40
      %s58 = sphi 0, %s58
      %s60 = sphi 0, %s58
      %s61 = sphi 0, %s60
      %s75 = sphi 0, %s61
      %s79 = sphi 0, %s79
      %s81 = sphi 0, %s79
      %s82 = sphi 0, %s81
      %s96 = sphi 0, %s82
      %s100 = sphi 0, %s100
      %s102 = sphi 0, %s100
      %s103 = sphi 0, %s102
      %s117 = sphi 0, %s103
      %s121 = sphi 0, %s121
      %s123 = sphi 0, %s121
      %s124 = sphi 0, %s123
      %s138 = sphi 0, %s124
      %s146 = sphi 0, %s148
      %s149 = sphi 0, %s146
      %s150 = sphi 0, %s149
      %s166 = sphi 0, %s150
      %s174 = sphi 0, %s176
      %s177 = sphi 0, %s174
      %s178 = sphi 0, %s177
      %s194 = sphi 0, %s178
      %s202 = sphi 0, %s204
      %s205 = sphi 0, %s202
      %s206 = sphi 0, %s205
      %s222 = sphi 0, %s206
    $region4: #{attention_gate.1} parent=1 // loop_header_branch
      %20 = sbr.rel (%p18) target = $region8
    $region5: #{attention_gate.1} parent=1 // loop_body
      %s22 = ssub.s32 %s17, 1
      %s23 = ssub.s32 %s17, 2
      %s30 = sadd.s32 1, %s25
      %p31 = scmp.ge.s32.totalorder %s30, 1
      %s32 = scalar_select %p31, 0, %s30
      %s33 = sadd.s32 1, %s24
      %s34 = scalar_select %p31, %s33, %s24
      %p35 = scmp.ge.s32.totalorder %s34, 2
      %s36 = scalar_select %p35, 0, %s34
      %s38 = sadd.s32 %s37, 1
      %p41 = scmp.eq.s32.totalorder %s17, 1
      %p42 = scmp.ne.s32.totalorder %s37, %s39
      %p43 = scmp.eq.s32.totalorder %s17, 0
      %p44 = por %p42, %p43
      %p45 = scmp.ne.s32.totalorder %s37, %s39
      %p46 = scmp.eq.s32.totalorder %s22, 1
      %p47 = por %p45, %p46
      %p48 = scmp.ne.s32.totalorder %s39, %s40
      %p49 = scmp.eq.s32.totalorder %s22, 0
      %p50 = por %p48, %p49
      %p51 = scmp.ne.s32.totalorder %s39, %s40
      %p52 = scmp.eq.s32.totalorder %s23, 1
      %p53 = por %p51, %p52
      %p55 = scmp.ne.s32.totalorder %s40, %s54
      %p56 = scmp.eq.s32.totalorder %s23, 0
      %p57 = por %p55, %p56
      %s59 = sadd.s32 %s58, 1
      %p62 = scmp.eq.s32.totalorder %s17, 1
      %p63 = scmp.ne.s32.totalorder %s58, %s60
      %p64 = scmp.eq.s32.totalorder %s17, 0
      %p65 = por %p63, %p64
      %p66 = scmp.ne.s32.totalorder %s58, %s60
      %p67 = scmp.eq.s32.totalorder %s22, 1
      %p68 = por %p66, %p67
      %p69 = scmp.ne.s32.totalorder %s60, %s61
      %p70 = scmp.eq.s32.totalorder %s22, 0
      %p71 = por %p69, %p70
      %p72 = scmp.ne.s32.totalorder %s60, %s61
      %p73 = scmp.eq.s32.totalorder %s23, 1
      %p74 = por %p72, %p73
      %p76 = scmp.ne.s32.totalorder %s61, %s75
      %p77 = scmp.eq.s32.totalorder %s23, 0
      %p78 = por %p76, %p77
      %s80 = sadd.s32 %s79, 1
      %p83 = scmp.eq.s32.totalorder %s17, 1
      %p84 = scmp.ne.s32.totalorder %s79, %s81
      %p85 = scmp.eq.s32.totalorder %s17, 0
      %p86 = por %p84, %p85
      %p87 = scmp.ne.s32.totalorder %s79, %s81
      %p88 = scmp.eq.s32.totalorder %s22, 1
      %p89 = por %p87, %p88
      %p90 = scmp.ne.s32.totalorder %s81, %s82
      %p91 = scmp.eq.s32.totalorder %s22, 0
      %p92 = por %p90, %p91
      %p93 = scmp.ne.s32.totalorder %s81, %s82
      %p94 = scmp.eq.s32.totalorder %s23, 1
      %p95 = por %p93, %p94
      %p97 = scmp.ne.s32.totalorder %s82, %s96
      %p98 = scmp.eq.s32.totalorder %s23, 0
      %p99 = por %p97, %p98
      %s101 = sadd.s32 %s100, 1
      %p104 = scmp.eq.s32.totalorder %s17, 1
      %p105 = scmp.ne.s32.totalorder %s100, %s102
      %p106 = scmp.eq.s32.totalorder %s17, 0
      %p107 = por %p105, %p106
      %p108 = scmp.ne.s32.totalorder %s100, %s102
      %p109 = scmp.eq.s32.totalorder %s22, 1
      %p110 = por %p108, %p109
      %p111 = scmp.ne.s32.totalorder %s102, %s103
      %p112 = scmp.eq.s32.totalorder %s22, 0
      %p113 = por %p111, %p112
      %p114 = scmp.ne.s32.totalorder %s102, %s103
      %p115 = scmp.eq.s32.totalorder %s23, 1
      %p116 = por %p114, %p115
      %p118 = scmp.ne.s32.totalorder %s103, %s117
      %p119 = scmp.eq.s32.totalorder %s23, 0
      %p120 = por %p118, %p119
      %s122 = sadd.s32 %s121, 1
      %p125 = scmp.eq.s32.totalorder %s17, 1
      %p126 = scmp.ne.s32.totalorder %s121, %s123
      %p127 = scmp.eq.s32.totalorder %s17, 0
      %p128 = por %p126, %p127
      %p129 = scmp.ne.s32.totalorder %s121, %s123
      %p130 = scmp.eq.s32.totalorder %s22, 1
      %p131 = por %p129, %p130
      %p132 = scmp.ne.s32.totalorder %s123, %s124
      %p133 = scmp.eq.s32.totalorder %s22, 0
      %p134 = por %p132, %p133
      %p135 = scmp.ne.s32.totalorder %s123, %s124
      %p136 = scmp.eq.s32.totalorder %s23, 1
      %p137 = por %p135, %p136
      %p139 = scmp.ne.s32.totalorder %s124, %s138
      %p140 = scmp.eq.s32.totalorder %s23, 0
      %p141 = por %p139, %p140
      %s142 = ssub.s32 %s24, %s36
      %s143 = ssub.s32 %s25, %s32
      %s144 = sor.u32 %s142, %s143
      %p145 = scmp.eq.s32.totalorder %s144, 0
      %s147 = sadd.s32 %s146, 1
      %s148 = scalar_select %p145, %s146, %s147
      %p151 = pneg %p145
      %p152 = scmp.eq.s32.totalorder %s17, 1
      %p153 = por %p151, %p152
      %p154 = scmp.ne.s32.totalorder %s146, %s149
      %p155 = scmp.eq.s32.totalorder %s17, 0
      %p156 = por %p154, %p155
      %p157 = scmp.ne.s32.totalorder %s146, %s149
      %p158 = scmp.eq.s32.totalorder %s22, 1
      %p159 = por %p157, %p158
      %p160 = scmp.ne.s32.totalorder %s149, %s150
      %p161 = scmp.eq.s32.totalorder %s22, 0
      %p162 = por %p160, %p161
      %p163 = scmp.ne.s32.totalorder %s149, %s150
      %p164 = scmp.eq.s32.totalorder %s23, 1
      %p165 = por %p163, %p164
      %p167 = scmp.ne.s32.totalorder %s150, %s166
      %p168 = scmp.eq.s32.totalorder %s23, 0
      %p169 = por %p167, %p168
      %s170 = ssub.s32 %s24, %s36
      %s171 = ssub.s32 %s25, %s32
      %s172 = sor.u32 %s170, %s171
      %p173 = scmp.eq.s32.totalorder %s172, 0
      %s175 = sadd.s32 %s174, 1
      %s176 = scalar_select %p173, %s174, %s175
      %p179 = pneg %p173
      %p180 = scmp.eq.s32.totalorder %s17, 1
      %p181 = por %p179, %p180
      %p182 = scmp.ne.s32.totalorder %s174, %s177
      %p183 = scmp.eq.s32.totalorder %s17, 0
      %p184 = por %p182, %p183
      %p185 = scmp.ne.s32.totalorder %s174, %s177
      %p186 = scmp.eq.s32.totalorder %s22, 1
      %p187 = por %p185, %p186
      %p188 = scmp.ne.s32.totalorder %s177, %s178
      %p189 = scmp.eq.s32.totalorder %s22, 0
      %p190 = por %p188, %p189
      %p191 = scmp.ne.s32.totalorder %s177, %s178
      %p192 = scmp.eq.s32.totalorder %s23, 1
      %p193 = por %p191, %p192
      %p195 = scmp.ne.s32.totalorder %s178, %s194
      %p196 = scmp.eq.s32.totalorder %s23, 0
      %p197 = por %p195, %p196
      %s198 = ssub.s32 %s24, %s36
      %s199 = ssub.s32 %s25, %s32
      %s200 = sor.u32 %s198, %s199
      %p201 = scmp.eq.s32.totalorder %s200, 0
      %s203 = sadd.s32 %s202, 1
      %s204 = scalar_select %p201, %s202, %s203
      %p207 = pneg %p201
      %p208 = scmp.eq.s32.totalorder %s17, 1
      %p209 = por %p207, %p208
      %p210 = scmp.ne.s32.totalorder %s202, %s205
      %p211 = scmp.eq.s32.totalorder %s17, 0
      %p212 = por %p210, %p211
      %p213 = scmp.ne.s32.totalorder %s202, %s205
      %p214 = scmp.eq.s32.totalorder %s22, 1
      %p215 = por %p213, %p214
      %p216 = scmp.ne.s32.totalorder %s205, %s206
      %p217 = scmp.eq.s32.totalorder %s22, 0
      %p218 = por %p216, %p217
      %p219 = scmp.ne.s32.totalorder %s205, %s206
      %p220 = scmp.eq.s32.totalorder %s23, 1
      %p221 = por %p219, %p220
      %p223 = scmp.ne.s32.totalorder %s206, %s222
      %p224 = scmp.eq.s32.totalorder %s23, 0
      %p225 = por %p223, %p224
      %p226 = scmp.le.s32.totalorder 1, %s17
      %p227 = scmp.lt.s32.totalorder %s17, 3
      %p228 = pnand %p226, %p227
      %p229 = pneg %p228
      // Predicated region
      $region9: #{attention_gate.1} parent=5 // pred_check
        _
      $region10: #{attention_gate.1} parent=5 // pred_check_branch
        %231 = sbr.rel (%p228) target = $region12
      $region11: #{attention_gate.1} parent=5 // pred_region
        %s232 = ssub.s32 %s17, 1
        // Predicated region
        $region13: #{attention_gate.1} parent=11 // pred_check
          %p233 = pneg %p50
        $region14: #{attention_gate.1} parent=11 // pred_check_branch
          %235 = sbr.rel (%p233) target = $region16
        $region15: #{attention_gate.1} parent=11 // pred_region
          %s237 = ssub.s32 128, 128
          %238 = vsyncadd [#allocation4], %s237
          %s240 = sshll.u32 %s0, 4
          %s241 = int_to_ptr.vmem [resolvable:$true] %s240
          %243 = dma.vmem_to_smem %s241, 128, [#allocation3], [#allocation4]
        $region16: #{attention_gate.1} parent=11 // pred_fallthru
          _
        // Predicated region
        $region17: #{attention_gate.1} parent=11 // pred_check
          %p244 = pneg %p71
        $region18: #{attention_gate.1} parent=11 // pred_check_branch
          %246 = sbr.rel (%p244) target = $region20
        $region19: #{attention_gate.1} parent=11 // pred_region
          %s248 = ssub.s32 128, 128
          %249 = vsyncadd [#allocation6], %s248
          %s251 = sshll.u32 %s1, 4
          %s252 = int_to_ptr.vmem [resolvable:$true] %s251
          %254 = dma.vmem_to_smem %s252, 128, [#allocation5], [#allocation6]
        $region20: #{attention_gate.1} parent=11 // pred_fallthru
          _
        // Predicated region
        $region21: #{attention_gate.1} parent=11 // pred_check
          %p255 = pneg %p92
        $region22: #{attention_gate.1} parent=11 // pred_check_branch
          %257 = sbr.rel (%p255) target = $region24
        $region23: #{attention_gate.1} parent=11 // pred_region
          %s259 = ssub.s32 16, 16
          %260 = vsyncadd [#allocation6], %s259
          %s262 = sshll.u32 %s2, 4
          %s263 = int_to_ptr.vmem [resolvable:$true] %s262
          %265 = dma.vmem_to_smem %s263, 16, [#allocation7], [#allocation6]
        $region24: #{attention_gate.1} parent=11 // pred_fallthru
          _
        // Predicated region
        $region25: #{attention_gate.1} parent=11 // pred_check
          %p266 = pneg %p113
        $region26: #{attention_gate.1} parent=11 // pred_check_branch
          %268 = sbr.rel (%p266) target = $region28
        $region27: #{attention_gate.1} parent=11 // pred_region
          %s270 = ssub.s32 16, 16
          %271 = vsyncadd [#allocation9], %s270
          %s273 = sshll.u32 %s3, 4
          %s274 = int_to_ptr.vmem [resolvable:$true] %s273
          %276 = dma.vmem_to_smem %s274, 16, [#allocation8], [#allocation9]
        $region28: #{attention_gate.1} parent=11 // pred_fallthru
          _
        // Predicated region
        $region29: #{attention_gate.1} parent=11 // pred_check
          %p277 = pneg %p134
        $region30: #{attention_gate.1} parent=11 // pred_check_branch
          %279 = sbr.rel (%p277) target = $region32
        $region31: #{attention_gate.1} parent=11 // pred_region
          _
        $region32: #{attention_gate.1} parent=11 // pred_fallthru
          _
      $region12: #{attention_gate.1} parent=5 // pred_fallthru
        _
      %p280 = scmp.lt.s32.totalorder %s17, 2
      // Predicated region
      $region33: #{attention_gate.1} parent=5 // pred_check
        %p281 = pneg %p280
      $region34: #{attention_gate.1} parent=5 // pred_check_branch
        %283 = sbr.rel (%p281) target = $region36
      $region35: #{attention_gate.1} parent=5 // pred_region
        // Predicated region
        $region37: #{attention_gate.1} parent=35 // pred_check
          %p284 = pneg %p156
        $region38: #{attention_gate.1} parent=35 // pred_check_branch
          %286 = sbr.rel (%p284) target = $region40
        $region39: #{attention_gate.1} parent=35 // pred_region
          %p287 = scmp.lt.s32.totalorder %s24, 1
          %s288 = scalar_select %p287, %s24, 1
          %p289 = scmp.lt.s32.totalorder %s25, 0
          %s290 = scalar_select %p289, %s25, 0
          %s291 = smul.addr %s288, 4
          %s292 = sadd.s32 %s290, %s291
          %s293 = smul.addr %s292, 2
          %s294 = scalar_lea.vmem %s5, %s293
        $region40: #{attention_gate.1} parent=35 // pred_fallthru
          _
        // Predicated region
        $region41: #{attention_gate.1} parent=35 // pred_check
          %p295 = pneg %p184
        $region42: #{attention_gate.1} parent=35 // pred_check_branch
          %297 = sbr.rel (%p295) target = $region44
        $region43: #{attention_gate.1} parent=35 // pred_region
          %p298 = scmp.lt.s32.totalorder %s24, 1
          %s299 = scalar_select %p298, %s24, 1
          %p300 = scmp.lt.s32.totalorder %s25, 0
          %s301 = scalar_select %p300, %s25, 0
          %s302 = smul.addr %s299, 4
          %s303 = sadd.s32 %s301, %s302
          %s304 = smul.addr %s303, 2
          %s305 = scalar_lea.vmem %s6, %s304
        $region44: #{attention_gate.1} parent=35 // pred_fallthru
          _
      $region36: #{attention_gate.1} parent=5 // pred_fallthru
        _
      %p306 = scmp.le.s32.totalorder 1, %s17
      %p307 = scmp.lt.s32.totalorder %s17, 3
      %p308 = pnand %p306, %p307
      %p309 = pneg %p308
      // Predicated region
      $region45: #{attention_gate.1} parent=5 // pred_check
        _
      $region46: #{attention_gate.1} parent=5 // pred_check_branch
        %311 = sbr.rel (%p308) target = $region48
      $region47: #{attention_gate.1} parent=5 // pred_region
        %s312 = ssub.s32 %s17, 1
        // Predicated region
        $region49: #{attention_gate.1} parent=47 // pred_check
          %p313 = pneg %p50
        $region50: #{attention_gate.1} parent=47 // pred_check_branch
          %315 = sbr.rel (%p313) target = $region52
        $region51: #{attention_gate.1} parent=47 // pred_region
          %316 = dma.done [#allocation4], 128
        $region52: #{attention_gate.1} parent=47 // pred_fallthru
          _
        // Predicated region
        $region53: #{attention_gate.1} parent=47 // pred_check
          %p317 = pneg %p71
        $region54: #{attention_gate.1} parent=47 // pred_check_branch
          %319 = sbr.rel (%p317) target = $region56
        $region55: #{attention_gate.1} parent=47 // pred_region
          %320 = dma.done [#allocation6], 128
        $region56: #{attention_gate.1} parent=47 // pred_fallthru
          _
        // Predicated region
        $region57: #{attention_gate.1} parent=47 // pred_check
          %p321 = pneg %p92
        $region58: #{attention_gate.1} parent=47 // pred_check_branch
          %323 = sbr.rel (%p321) target = $region60
        $region59: #{attention_gate.1} parent=47 // pred_region
          %324 = dma.done [#allocation6], 16
        $region60: #{attention_gate.1} parent=47 // pred_fallthru
          _
        // Predicated region
        $region61: #{attention_gate.1} parent=47 // pred_check
          %p325 = pneg %p113
        $region62: #{attention_gate.1} parent=47 // pred_check_branch
          %327 = sbr.rel (%p325) target = $region64
        $region63: #{attention_gate.1} parent=47 // pred_region
          %328 = dma.done [#allocation9], 16
        $region64: #{attention_gate.1} parent=47 // pred_fallthru
          _
        %329 = sfence
        %p330 = pneg %p50
        %p331 = pneg %p47
        %p332 = pneg %p71
        %p333 = pneg %p68
        %p334 = pneg %p92
        %p335 = pneg %p89
        %p336 = pneg %p113
        %p337 = pneg %p110
        %p338 = pneg %p134
        %p339 = pneg %p131
        %p340 = scmp.lt.s32.totalorder %s26, 1
        %s341 = scalar_select %p340, %s26, 1
        %p342 = scmp.lt.s32.totalorder %s27, 0
        %s343 = scalar_select %p342, %s27, 0
        %s344 = smul.addr %s341, 4
        %s345 = sadd.s32 %s343, %s344
        %s346 = smul.addr %s345, 2
        %s347 = scalar_lea.vmem %s5, %s346
        %p348 = pneg %p162
        %p349 = pneg %p159
        %p350 = scmp.lt.s32.totalorder %s26, 1
        %s351 = scalar_select %p350, %s26, 1
        %p352 = scmp.lt.s32.totalorder %s27, 0
        %s353 = scalar_select %p352, %s27, 0
        %s354 = smul.addr %s351, 4
        %s355 = sadd.s32 %s353, %s354
        %s356 = smul.addr %s355, 2
        %s357 = scalar_lea.vmem %s6, %s356
        %p358 = pneg %p190
        %p359 = pneg %p187
        %p360 = pneg %p218
        %p361 = pneg %p215
        %p362 = scmp.lt.s32.totalorder %s26, 1
        %s363 = scalar_select %p362, %s26, 1
        %p364 = scmp.lt.s32.totalorder %s27, 0
        %s365 = scalar_select %p364, %s27, 0
        %s366 = smul.addr %s363, 4
        %s367 = sadd.s32 %s365, %s366
        %s368 = smul.addr %s367, 2
        %s369 = scalar_lea.vmem %s7, %s368
        %p370 = scmp.lt.s32.totalorder %s26, 1
        %s371 = scalar_select %p370, %s26, 1
        %p372 = scmp.lt.s32.totalorder %s27, 0
        %s373 = scalar_select %p372, %s27, 0
        %s374 = smul.addr %s371, 4
        %s375 = sadd.s32 %s373, %s374
        %s376 = smul.addr %s375, 2
        %s377 = scalar_lea.vmem %s5, %s376
        %p378 = scmp.lt.s32.totalorder %s26, 1
        %s379 = scalar_select %p378, %s26, 1
        %p380 = scmp.lt.s32.totalorder %s27, 0
        %s381 = scalar_select %p380, %s27, 0
        %s382 = smul.addr %s379, 4
        %s383 = sadd.s32 %s381, %s382
        %s384 = smul.addr %s383, 2
        %s385 = scalar_lea.vmem %s6, %s384
        %p386 = scmp.lt.s32.totalorder %s26, 1
        %s387 = scalar_select %p386, %s26, 1
        %p388 = scmp.lt.s32.totalorder %s27, 0
        %s389 = scalar_select %p388, %s27, 0
        %s390 = smul.addr %s387, 4
        %s391 = sadd.s32 %s389, %s390
        %s392 = smul.addr %s391, 2
        %s393 = scalar_lea.vmem %s7, %s392
        %v394 = vld [vmem:[%s377] sm:$0x3]
        %v395 = vld [vmem:[%s377 + $0x2] sm:$0x3]
        %v396 = vld [vmem:[%s377 + $0x4] sm:$0x3]
        %v397 = vld [vmem:[%s377 + $0x6] sm:$0x3]
        %v398 = vld [vmem:[%s385] sm:$0x3]
        %v399 = vld [vmem:[%s385 + $0x2] sm:$0x3]
        %v400 = vld [vmem:[%s385 + $0x4] sm:$0x3]
        %v401 = vld [vmem:[%s385 + $0x6] sm:$0x3]
        %s402 = sld [smem:[#allocation2]]
        %v403 = vstv %s402
        %s404 = sld [smem:[#allocation7]]
        %v405 = vstv %s404
        %s406 = sld [smem:[#allocation3]]
        %v407 = vstv %s406
        %v408 = vmul.f32 %v407, %v394
        %v409 = vadd.f32 %v405, %v408
        %s410 = sld [smem:[#allocation3 + $0x1]]
        %v411 = vstv %s410
        %v412 = vmul.f32 %v411, %v395
        %v413 = vadd.f32 %v409, %v412
        %s414 = sld [smem:[#allocation3 + $0x2]]
        %v415 = vstv %s414
        %v416 = vmul.f32 %v415, %v396
        %v417 = vadd.f32 %v413, %v416
        %s418 = sld [smem:[#allocation3 + $0x3]]
        %v419 = vstv %s418
        %v420 = vmul.f32 %v419, %v397
        %v421 = vadd.f32 %v417, %v420
        %s422 = sld [smem:[#allocation5]]
        %v423 = vstv %s422
        %v424 = vmul.f32 %v423, %v398
        %v425 = vadd.f32 %v421, %v424
        %s426 = sld [smem:[#allocation5 + $0x1]]
        %v427 = vstv %s426
        %v428 = vmul.f32 %v427, %v399
        %v429 = vadd.f32 %v425, %v428
        %s430 = sld [smem:[#allocation5 + $0x2]]
        %v431 = vstv %s430
        %v432 = vmul.f32 %v431, %v400
        %v433 = vadd.f32 %v429, %v432
        %s434 = sld [smem:[#allocation5 + $0x3]]
        %v435 = vstv %s434
        %v436 = vmul.f32 %v435, %v401
        %v437 = vadd.f32 %v433, %v436
        %s438 = sld [smem:[#allocation8]]
        %v439 = vmax.f32 %v437, 0.0
        %v440 = vstv %s438
        %v441 = vmul.f32 %v440, %v439
        %v442 = vadd.f32 %v403, %v441
        %s443 = sld [smem:[#allocation7 + $0x1]]
        %v444 = vstv %s443
        %s445 = sld [smem:[#allocation3 + $0x80]]
        %v446 = vstv %s445
        %v447 = vmul.f32 %v446, %v394
        %v448 = vadd.f32 %v444, %v447
        %s449 = sld [smem:[#allocation3 + $0x81]]
        %v450 = vstv %s449
        %v451 = vmul.f32 %v450, %v395
        %v452 = vadd.f32 %v448, %v451
        %s453 = sld [smem:[#allocation3 + $0x82]]
        %v454 = vstv %s453
        %v455 = vmul.f32 %v454, %v396
        %v456 = vadd.f32 %v452, %v455
        %s457 = sld [smem:[#allocation3 + $0x83]]
        %v458 = vstv %s457
        %v459 = vmul.f32 %v458, %v397
        %v460 = vadd.f32 %v456, %v459
        %s461 = sld [smem:[#allocation5 + $0x80]]
        %v462 = vstv %s461
        %v463 = vmul.f32 %v462, %v398
        %v464 = vadd.f32 %v460, %v463
        %s465 = sld [smem:[#allocation5 + $0x81]]
        %v466 = vstv %s465
        %v467 = vmul.f32 %v466, %v399
        %v468 = vadd.f32 %v464, %v467
        %s469 = sld [smem:[#allocation5 + $0x82]]
        %v470 = vstv %s469
        %v471 = vmul.f32 %v470, %v400
        %v472 = vadd.f32 %v468, %v471
        %s473 = sld [smem:[#allocation5 + $0x83]]
        %v474 = vstv %s473
        %v475 = vmul.f32 %v474, %v401
        %v476 = vadd.f32 %v472, %v475
        %s477 = sld [smem:[#allocation8 + $0x1]]
        %v478 = vmax.f32 %v476, 0.0
        %v479 = vstv %s477
        %v480 = vmul.f32 %v479, %v478
        %v481 = vadd.f32 %v442, %v480
        %s482 = sld [smem:[#allocation7 + $0x2]]
        %v483 = vstv %s482
        %s484 = sld [smem:[#allocation3 + $0x100]]
        %v485 = vstv %s484
        %v486 = vmul.f32 %v485, %v394
        %v487 = vadd.f32 %v483, %v486
        %s488 = sld [smem:[#allocation3 + $0x101]]
        %v489 = vstv %s488
        %v490 = vmul.f32 %v489, %v395
        %v491 = vadd.f32 %v487, %v490
        %s492 = sld [smem:[#allocation3 + $0x102]]
        %v493 = vstv %s492
        %v494 = vmul.f32 %v493, %v396
        %v495 = vadd.f32 %v491, %v494
        %s496 = sld [smem:[#allocation3 + $0x103]]
        %v497 = vstv %s496
        %v498 = vmul.f32 %v497, %v397
        %v499 = vadd.f32 %v495, %v498
        %s500 = sld [smem:[#allocation5 + $0x100]]
        %v501 = vstv %s500
        %v502 = vmul.f32 %v501, %v398
        %v503 = vadd.f32 %v499, %v502
        %s504 = sld [smem:[#allocation5 + $0x101]]
        %v505 = vstv %s504
        %v506 = vmul.f32 %v505, %v399
        %v507 = vadd.f32 %v503, %v506
        %s508 = sld [smem:[#allocation5 + $0x102]]
        %v509 = vstv %s508
        %v510 = vmul.f32 %v509, %v400
        %v511 = vadd.f32 %v507, %v510
        %s512 = sld [smem:[#allocation5 + $0x103]]
        %v513 = vstv %s512
        %v514 = vmul.f32 %v513, %v401
        %v515 = vadd.f32 %v511, %v514
        %s516 = sld [smem:[#allocation8 + $0x2]]
        %v517 = vmax.f32 %v515, 0.0
        %v518 = vstv %s516
        %v519 = vmul.f32 %v518, %v517
        %v520 = vadd.f32 %v481, %v519
        %s521 = sld [smem:[#allocation7 + $0x3]]
        %v522 = vstv %s521
        %s523 = sld [smem:[#allocation3 + $0x180]]
        %v524 = vstv %s523
        %v525 = vmul.f32 %v524, %v394
        %v526 = vadd.f32 %v522, %v525
        %s527 = sld [smem:[#allocation3 + $0x181]]
        %v528 = vstv %s527
        %v529 = vmul.f32 %v528, %v395
        %v530 = vadd.f32 %v526, %v529
        %s531 = sld [smem:[#allocation3 + $0x182]]
        %v532 = vstv %s531
        %v533 = vmul.f32 %v532, %v396
        %v534 = vadd.f32 %v530, %v533
        %s535 = sld [smem:[#allocation3 + $0x183]]
        %v536 = vstv %s535
        %v537 = vmul.f32 %v536, %v397
        %v538 = vadd.f32 %v534, %v537
        %s539 = sld [smem:[#allocation5 + $0x180]]
        %v540 = vstv %s539
        %v541 = vmul.f32 %v540, %v398
        %v542 = vadd.f32 %v538, %v541
        %s543 = sld [smem:[#allocation5 + $0x181]]
        %v544 = vstv %s543
        %v545 = vmul.f32 %v544, %v399
        %v546 = vadd.f32 %v542, %v545
        %s547 = sld [smem:[#allocation5 + $0x182]]
        %v548 = vstv %s547
        %v549 = vmul.f32 %v548, %v400
        %v550 = vadd.f32 %v546, %v549
        %s551 = sld [smem:[#allocation5 + $0x183]]
        %v552 = vstv %s551
        %v553 = vmul.f32 %v552, %v401
        %v554 = vadd.f32 %v550, %v553
        %s555 = sld [smem:[#allocation8 + $0x3]]
        %v556 = vmax.f32 %v554, 0.0
        %v557 = vstv %s555
        %v558 = vmul.f32 %v557, %v556
        %v559 = vadd.f32 %v520, %v558
        %s560 = sld [smem:[#allocation7 + $0x4]]
        %v561 = vstv %s560
        %s562 = sld [smem:[#allocation3 + $0x200]]
        %v563 = vstv %s562
        %v564 = vmul.f32 %v563, %v394
        %v565 = vadd.f32 %v561, %v564
        %s566 = sld [smem:[#allocation3 + $0x201]]
        %v567 = vstv %s566
        %v568 = vmul.f32 %v567, %v395
        %v569 = vadd.f32 %v565, %v568
        %s570 = sld [smem:[#allocation3 + $0x202]]
        %v571 = vstv %s570
        %v572 = vmul.f32 %v571, %v396
        %v573 = vadd.f32 %v569, %v572
        %s574 = sld [smem:[#allocation3 + $0x203]]
        %v575 = vstv %s574
        %v576 = vmul.f32 %v575, %v397
        %v577 = vadd.f32 %v573, %v576
        %s578 = sld [smem:[#allocation5 + $0x200]]
        %v579 = vstv %s578
        %v580 = vmul.f32 %v579, %v398
        %v581 = vadd.f32 %v577, %v580
        %s582 = sld [smem:[#allocation5 + $0x201]]
        %v583 = vstv %s582
        %v584 = vmul.f32 %v583, %v399
        %v585 = vadd.f32 %v581, %v584
        %s586 = sld [smem:[#allocation5 + $0x202]]
        %v587 = vstv %s586
        %v588 = vmul.f32 %v587, %v400
        %v589 = vadd.f32 %v585, %v588
        %s590 = sld [smem:[#allocation5 + $0x203]]
        %v591 = vstv %s590
        %v592 = vmul.f32 %v591, %v401
        %v593 = vadd.f32 %v589, %v592
        %s594 = sld [smem:[#allocation8 + $0x4]]
        %v595 = vmax.f32 %v593, 0.0
        %v596 = vstv %s594
        %v597 = vmul.f32 %v596, %v595
        %v598 = vadd.f32 %v559, %v597
        %s599 = sld [smem:[#allocation7 + $0x5]]
        %v600 = vstv %s599
        %s601 = sld [smem:[#allocation3 + $0x280]]
        %v602 = vstv %s601
        %v603 = vmul.f32 %v602, %v394
        %v604 = vadd.f32 %v600, %v603
        %s605 = sld [smem:[#allocation3 + $0x281]]
        %v606 = vstv %s605
        %v607 = vmul.f32 %v606, %v395
        %v608 = vadd.f32 %v604, %v607
        %s609 = sld [smem:[#allocation3 + $0x282]]
        %v610 = vstv %s609
        %v611 = vmul.f32 %v610, %v396
        %v612 = vadd.f32 %v608, %v611
        %s613 = sld [smem:[#allocation3 + $0x283]]
        %v614 = vstv %s613
        %v615 = vmul.f32 %v614, %v397
        %v616 = vadd.f32 %v612, %v615
        %s617 = sld [smem:[#allocation5 + $0x280]]
        %v618 = vstv %s617
        %v619 = vmul.f32 %v618, %v398
        %v620 = vadd.f32 %v616, %v619
        %s621 = sld [smem:[#allocation5 + $0x281]]
        %v622 = vstv %s621
        %v623 = vmul.f32 %v622, %v399
        %v624 = vadd.f32 %v620, %v623
        %s625 = sld [smem:[#allocation5 + $0x282]]
        %v626 = vstv %s625
        %v627 = vmul.f32 %v626, %v400
        %v628 = vadd.f32 %v624, %v627
        %s629 = sld [smem:[#allocation5 + $0x283]]
        %v630 = vstv %s629
        %v631 = vmul.f32 %v630, %v401
        %v632 = vadd.f32 %v628, %v631
        %s633 = sld [smem:[#allocation8 + $0x5]]
        %v634 = vmax.f32 %v632, 0.0
        %v635 = vstv %s633
        %v636 = vmul.f32 %v635, %v634
        %v637 = vadd.f32 %v598, %v636
        %s638 = sld [smem:[#allocation7 + $0x6]]
        %v639 = vstv %s638
        %s640 = sld [smem:[#allocation3 + $0x300]]
        %v641 = vstv %s640
        %v642 = vmul.f32 %v641, %v394
        %v643 = vadd.f32 %v639, %v642
        %s644 = sld [smem:[#allocation3 + $0x301]]
        %v645 = vstv %s644
        %v646 = vmul.f32 %v645, %v395
        %v647 = vadd.f32 %v643, %v646
        %s648 = sld [smem:[#allocation3 + $0x302]]
        %v649 = vstv %s648
        %v650 = vmul.f32 %v649, %v396
        %v651 = vadd.f32 %v647, %v650
        %s652 = sld [smem:[#allocation3 + $0x303]]
        %v653 = vstv %s652
        %v654 = vmul.f32 %v653, %v397
        %v655 = vadd.f32 %v651, %v654
        %s656 = sld [smem:[#allocation5 + $0x300]]
        %v657 = vstv %s656
        %v658 = vmul.f32 %v657, %v398
        %v659 = vadd.f32 %v655, %v658
        %s660 = sld [smem:[#allocation5 + $0x301]]
        %v661 = vstv %s660
        %v662 = vmul.f32 %v661, %v399
        %v663 = vadd.f32 %v659, %v662
        %s664 = sld [smem:[#allocation5 + $0x302]]
        %v665 = vstv %s664
        %v666 = vmul.f32 %v665, %v400
        %v667 = vadd.f32 %v663, %v666
        %s668 = sld [smem:[#allocation5 + $0x303]]
        %v669 = vstv %s668
        %v670 = vmul.f32 %v669, %v401
        %v671 = vadd.f32 %v667, %v670
        %s672 = sld [smem:[#allocation8 + $0x6]]
        %v673 = vmax.f32 %v671, 0.0
        %v674 = vstv %s672
        %v675 = vmul.f32 %v674, %v673
        %v676 = vadd.f32 %v637, %v675
        %s677 = sld [smem:[#allocation7 + $0x7]]
        %v678 = vstv %s677
        %s679 = sld [smem:[#allocation3 + $0x380]]
        %v680 = vstv %s679
        %v681 = vmul.f32 %v680, %v394
        %v682 = vadd.f32 %v678, %v681
        %s683 = sld [smem:[#allocation3 + $0x381]]
        %v684 = vstv %s683
        %v685 = vmul.f32 %v684, %v395
        %v686 = vadd.f32 %v682, %v685
        %s687 = sld [smem:[#allocation3 + $0x382]]
        %v688 = vstv %s687
        %v689 = vmul.f32 %v688, %v396
        %v690 = vadd.f32 %v686, %v689
        %s691 = sld [smem:[#allocation3 + $0x383]]
        %v692 = vstv %s691
        %v693 = vmul.f32 %v692, %v397
        %v694 = vadd.f32 %v690, %v693
        %s695 = sld [smem:[#allocation5 + $0x380]]
        %v696 = vstv %s695
        %v697 = vmul.f32 %v696, %v398
        %v698 = vadd.f32 %v694, %v697
        %s699 = sld [smem:[#allocation5 + $0x381]]
        %v700 = vstv %s699
        %v701 = vmul.f32 %v700, %v399
        %v702 = vadd.f32 %v698, %v701
        %s703 = sld [smem:[#allocation5 + $0x382]]
        %v704 = vstv %s703
        %v705 = vmul.f32 %v704, %v400
        %v706 = vadd.f32 %v702, %v705
        %s707 = sld [smem:[#allocation5 + $0x383]]
        %v708 = vstv %s707
        %v709 = vmul.f32 %v708, %v401
        %v710 = vadd.f32 %v706, %v709
        %s711 = sld [smem:[#allocation8 + $0x7]]
        %v712 = vmax.f32 %v710, 0.0
        %v713 = vstv %s711
        %v714 = vmul.f32 %v713, %v712
        %v715 = vadd.f32 %v676, %v714
        %v716 = vxor.u32 %v715, 2147483648
        %v717 = vmul.f32 %v716, 1.442695
        %v718 = vpow.pop %v717
        %v719 = vadd.f32 %v718, 1.0
        %v720 = vrcp.pop %v719
        %v721 = vmul.f32 1.0, %v720
        %v722 = vmul.f32 %v721, %v398
        %v723 = vmul.f32 %v721, %v399
        %v724 = vmul.f32 %v721, %v400
        %v725 = vmul.f32 %v721, %v401
        %726 = vst [vmem:[%s393] sm:$0x3] %v722
        %727 = vst [vmem:[%s393 + $0x2] sm:$0x3] %v723
        %728 = vst [vmem:[%s393 + $0x4] sm:$0x3] %v724
        %729 = vst [vmem:[%s393 + $0x6] sm:$0x3] %v725
        %p730 = scmp.lt.s32.totalorder %s26, 1
        %s731 = scalar_select %p730, %s26, 1
        %p732 = scmp.lt.s32.totalorder %s27, 0
        %s733 = scalar_select %p732, %s27, 0
        %s734 = smul.addr %s731, 4
        %s735 = sadd.s32 %s733, %s734
        %s736 = smul.addr %s735, 2
        %s737 = scalar_lea.vmem %s7, %s736
        // Predicated region
        $region65: #{attention_gate.1} parent=47 // pred_check
          %p738 = pneg %p215
        $region66: #{attention_gate.1} parent=47 // pred_check_branch
          %740 = sbr.rel (%p738) target = $region68
        $region67: #{attention_gate.1} parent=47 // pred_region
          _
        $region68: #{attention_gate.1} parent=47 // pred_fallthru
          _
      $region48: #{attention_gate.1} parent=5 // pred_fallthru
        _
      %p741 = scmp.le.s32.totalorder 2, %s17
      // Predicated region
      $region69: #{attention_gate.1} parent=5 // pred_check
        %p742 = pneg %p741
      $region70: #{attention_gate.1} parent=5 // pred_check_branch
        %744 = sbr.rel (%p742) target = $region72
      $region71: #{attention_gate.1} parent=5 // pred_region
        %s745 = ssub.s32 %s17, 2
        // Predicated region
        $region73: #{attention_gate.1} parent=71 // pred_check
          %p746 = pneg %p221
        $region74: #{attention_gate.1} parent=71 // pred_check_branch
          %748 = sbr.rel (%p746) target = $region76
        $region75: #{attention_gate.1} parent=71 // pred_region
          %p749 = scmp.lt.s32.totalorder %s28, 1
          %s750 = scalar_select %p749, %s28, 1
          %p751 = scmp.lt.s32.totalorder %s29, 0
          %s752 = scalar_select %p751, %s29, 0
          %s753 = smul.addr %s750, 4
          %s754 = sadd.s32 %s752, %s753
          %s755 = smul.addr %s754, 2
          %s756 = scalar_lea.vmem %s7, %s755
        $region76: #{attention_gate.1} parent=71 // pred_fallthru
          _
      $region72: #{attention_gate.1} parent=5 // pred_fallthru
        _
    $region6: #{attention_gate.1} parent=1 // loop_footer
      %s21 = sadd.s32 1, %s17
    $region7: #{attention_gate.1} parent=1 // loop_footer_branch
      %16 = sbr.rel target = $region3
    $region8: #{attention_gate.1} parent=1 // loop_exit
      _
    %757 = vsyncpa [#allocation4], 1
    %s758 = scalar_lea.sflag [#allocation4], 1
    %759 = vsyncpa %s758, 1
    %760 = vsyncpa [#allocation6], 1
    %761 = vsyncpa [#allocation9], 1

</llo_original>
